<compile_context>
chip_gen: v7x
topology: tpu7x:2x2x1
jax: 0.10.0
libtpu: 0.0.40
codegen_flags: <defaults>
</compile_context>

<pallas_src>
import functools

import jax
import jax.numpy as jnp
from jax.experimental import pallas as pl
from jax.experimental.pallas import tpu as pltpu

NUM_CLASSES = 10
CLS_PAD = 128                                    # class dim padded to a full lane register
DIMS = (784, 512, 256, 128, 64, NUM_CLASSES)     # logical (PyTorch) dims
PAD_DIMS = (784, 512, 256, 128, 128, CLS_PAD)    # dims as seen by the kernel
BN_EPS = 1e-5
NEG_BIG = -1e30                                  # bias on padded logit columns


def mlp_kernel(x_ref,
               w0, b0, w1, b1, w2, b2, w3, b3, w4, b4,
               o_ref):
    """Whole-MLP eval forward for one batch tile; all operands resident in VMEM.

    BatchNorm is pre-folded into (w, b); Dropout is identity in eval mode.
    Matmuls run bf16 x bf16 -> f32 on the MXU; bias/ReLU/softmax in f32.
    """

    def layer(h, w_ref, b_ref):
        y = jnp.dot(h, w_ref[...], preferred_element_type=jnp.float32)
        y = jnp.maximum(y + b_ref[...], 0.0)          # bias + ReLU in f32
        return y.astype(jnp.bfloat16)                 # bf16 operand for the next MXU op

    h = x_ref[...]                                    # bf16 (bt, 784)
    h = layer(h, w0, b0)
    # dropout (p=0.3) -> identity in eval mode
    h = layer(h, w1, b1)
    h = layer(h, w2, b2)
    # dropout (p=0.3) -> identity in eval mode
    h = layer(h, w3, b3)                              # (bt, 128); cols 64.. are exactly 0

    logits = jnp.dot(h, w4[...], preferred_element_type=jnp.float32) + b4[...]
    # Padded class columns have zero weights and bias -1e30: they never win the
    # max and contribute exp(...)==0 to the LSE, so log-softmax stays correct.
    m = jnp.max(logits, axis=-1, keepdims=True)
    z = logits - m
    lse = jnp.log(jnp.sum(jnp.exp(z), axis=-1, keepdims=True))
    o_ref[...] = (z - lse).astype(o_ref.dtype)


def init_params(key):
    """Deterministic parameter init matching the PyTorch module's shapes.

    Linear weights are stored transposed as (in_features, out_features) so the
    kernel computes y = x @ W + b.
    """
    params = []
    keys = jax.random.split(key, 30)
    ki = 0
    for li in range(5):
        fan_in, fan_out = DIMS[li], DIMS[li + 1]
        bound = 1.0 / float(fan_in) ** 0.5
        w = jax.random.uniform(keys[ki], (fan_in, fan_out), jnp.float32,
                               minval=-bound, maxval=bound); ki += 1
        b = jax.random.uniform(keys[ki], (1, fan_out), jnp.float32,
                               minval=-bound, maxval=bound); ki += 1
        layer = {"w": w, "b": b}
        if li < 4:  # BatchNorm1d after fc0..fc3
            layer["gamma"] = 1.0 + 0.1 * jax.random.normal(keys[ki], (1, fan_out)); ki += 1
            layer["beta"] = 0.1 * jax.random.normal(keys[ki], (1, fan_out)); ki += 1
            layer["running_mean"] = 0.1 * jax.random.normal(keys[ki], (1, fan_out)); ki += 1
            layer["running_var"] = 0.5 + jax.random.uniform(keys[ki + 1], (1, fan_out)); ki += 2
        params.append(layer)
    return params


def fold_and_pack(params):
    """Fold eval-mode BN into (w, b), pad to lane-friendly dims, cast w -> bf16.

    Returns the flat [w0, b0, ..., w4, b4] argument list for the kernel.
    """
    flat = []
    for li, p in enumerate(params):
        w = p["w"]
        b = p["b"]
        if li < 4:
            scale = p["gamma"] / jnp.sqrt(p["running_var"] + BN_EPS)   # (1, F)
            shift = p["beta"] - p["running_mean"] * scale
            w = w * scale
            b = b * scale + shift
        in_pad = PAD_DIMS[li] - w.shape[0]
        out_pad = PAD_DIMS[li + 1] - w.shape[1]
        if in_pad or out_pad:
            w = jnp.pad(w, ((0, in_pad), (0, out_pad)))                # zero rows/cols
            fill = NEG_BIG if li == 4 else 0.0
            b = jnp.pad(b, ((0, 0), (0, out_pad)), constant_values=fill)
        flat.append(w.astype(jnp.bfloat16))
        flat.append(b.astype(jnp.float32))
    return flat


def _round_up(n, m):
    return ((n + m - 1) // m) * m


@functools.partial(jax.jit, static_argnames=("batch_tile",))
def mlp_forward(x_nchw, flat, batch_tile=512):
    """Eval-mode forward. `flat` comes from fold_and_pack()."""
    B = x_nchw.shape[0]
    x = x_nchw.reshape(B, -1).astype(jnp.bfloat16)     # x.view(B, -1); bf16 HBM stream
    assert x.shape[1] == DIMS[0]

    # Effective batch tile: as large as requested but never larger than the
    # (8-row aligned) batch. On v7x pick batch_tile <= B/2 so the >=2 parallel
    # grid steps shard across both TensorCores.
    bt = _round_up(min(batch_tile, B), 8)
    Bp = _round_up(B, bt)
    if Bp != B:
        x = jnp.pad(x, ((0, Bp - B), (0, 0)))          # zero rows; sliced off below

    in_specs = [pl.BlockSpec((bt, DIMS[0]), lambda i: (i, 0))]
    for p in flat:
        # Constant across the grid (index_map -> (0, 0)): fetched once, resident.
        in_specs.append(pl.BlockSpec(p.shape, lambda i: (0, 0)))
    out_specs = pl.BlockSpec((bt, CLS_PAD), lambda i: (i, 0))

    flops = 2 * Bp * sum(int(w.shape[0]) * int(w.shape[1]) for w in flat[0::2])
    bytes_accessed = (int(x.size) * x.dtype.itemsize
                      + sum(int(p.size) * p.dtype.itemsize for p in flat)
                      + Bp * CLS_PAD * 4)
    cost = pl.CostEstimate(flops=flops, transcendentals=Bp * CLS_PAD,
                           bytes_accessed=bytes_accessed)

    out = pl.pallas_call(
        mlp_kernel,
        out_shape=jax.ShapeDtypeStruct((Bp, CLS_PAD), jnp.float32),
        grid=(Bp // bt,),
        in_specs=in_specs,
        out_specs=out_specs,
        compiler_params=pltpu.CompilerParams(
            dimension_semantics=("parallel",),
            vmem_limit_bytes=48 * 1024 * 1024),
        cost_estimate=cost,
    )(x, *flat)

    return out[:B, :NUM_CLASSES]


def mlp_reference(x_nchw, params):
    """Plain-JAX f32 reference (unfolded BN, eval mode) for correctness."""
    x = x_nchw.reshape(x_nchw.shape[0], -1).astype(jnp.float32)
    h = x
    for li in range(4):
        p = params[li]
        h = h @ p["w"] + p["b"]
        h = ((h - p["running_mean"])
             * (p["gamma"] / jnp.sqrt(p["running_var"] + BN_EPS)) + p["beta"])
        h = jnp.maximum(h, 0.0)
    logits = h @ params[4]["w"] + params[4]["b"]
    return jax.nn.log_softmax(logits, axis=1)


if __name__ == "__main__":
    key = jax.random.PRNGKey(0)
    kx, kp = jax.random.split(key)

    B = 8
    x = jax.random.normal(kx, (B, 1, 28, 28), jnp.float32)  # NCHW MNIST-like input

    params = init_params(kp)
    flat = fold_and_pack(params)

    out = jax.block_until_ready(mlp_forward(x, flat))

    ref = mlp_reference(x, params)
    assert out.shape == (B, NUM_CLASSES)
    # bf16 matmuls vs. pure-f32 reference -> loose but meaningful tolerance.
    assert jnp.allclose(out, ref, atol=7e-2, rtol=7e-2), "mismatch vs reference"
    # rows of log_softmax must sum (in prob space) to ~1 over the real classes
    assert jnp.allclose(jnp.exp(out).sum(axis=1), 1.0, atol=1e-3)

    print("KERNEL_OK")
</pallas_src>

<mosaic_0001>
module attributes {stable_mosaic.version = 11 : i64} {
  func.func @mlp_kernel(%arg0: i32, %arg1: memref<8x784xbf16, #tpu.memory_space<vmem>>, %arg2: memref<784x512xbf16, #tpu.memory_space<vmem>>, %arg3: memref<1x512xf32, #tpu.memory_space<vmem>>, %arg4: memref<512x256xbf16, #tpu.memory_space<vmem>>, %arg5: memref<1x256xf32, #tpu.memory_space<vmem>>, %arg6: memref<256x128xbf16, #tpu.memory_space<vmem>>, %arg7: memref<1x128xf32, #tpu.memory_space<vmem>>, %arg8: memref<128x128xbf16, #tpu.memory_space<vmem>>, %arg9: memref<1x128xf32, #tpu.memory_space<vmem>>, %arg10: memref<128x128xbf16, #tpu.memory_space<vmem>>, %arg11: memref<1x128xf32, #tpu.memory_space<vmem>>, %arg12: memref<8x128xf32, #tpu.memory_space<vmem>>) attributes {dimension_semantics = [#tpu.dimension_semantics<parallel>], iteration_bounds = array<i64: 1>, scalar_prefetch = 0 : i64, scratch_operands = 0 : i64, tpu.core_type = #tpu.core_type<tc>, window_params = [{transform_indices = @transform_0, window_bounds = array<i64: 8, 784>}, {pipeline_mode = #tpu.pipeline_mode<synchronous>, transform_indices = @transform_1, window_bounds = array<i64: 784, 512>}, {pipeline_mode = #tpu.pipeline_mode<synchronous>, transform_indices = @transform_2, window_bounds = array<i64: 1, 512>}, {pipeline_mode = #tpu.pipeline_mode<synchronous>, transform_indices = @transform_3, window_bounds = array<i64: 512, 256>}, {pipeline_mode = #tpu.pipeline_mode<synchronous>, transform_indices = @transform_4, window_bounds = array<i64: 1, 256>}, {pipeline_mode = #tpu.pipeline_mode<synchronous>, transform_indices = @transform_5, window_bounds = array<i64: 256, 128>}, {pipeline_mode = #tpu.pipeline_mode<synchronous>, transform_indices = @transform_6, window_bounds = array<i64: 1, 128>}, {pipeline_mode = #tpu.pipeline_mode<synchronous>, transform_indices = @transform_7, window_bounds = array<i64: 128, 128>}, {pipeline_mode = #tpu.pipeline_mode<synchronous>, transform_indices = @transform_8, window_bounds = array<i64: 1, 128>}, {pipeline_mode = #tpu.pipeline_mode<synchronous>, transform_indices = @transform_9, window_bounds = array<i64: 128, 128>}, {pipeline_mode = #tpu.pipeline_mode<synchronous>, transform_indices = @transform_10, window_bounds = array<i64: 1, 128>}, {transform_indices = @transform_11, window_bounds = array<i64: 8, 128>}]} {
    %c0 = arith.constant 0 : index
    %c0_0 = arith.constant 0 : index
    %0 = vector.load %arg1[%c0, %c0_0] : memref<8x784xbf16, #tpu.memory_space<vmem>>, vector<8x784xbf16>
    %c0_1 = arith.constant 0 : index
    %c0_2 = arith.constant 0 : index
    %1 = vector.load %arg2[%c0_1, %c0_2] : memref<784x512xbf16, #tpu.memory_space<vmem>>, vector<784x512xbf16>
    %cst = arith.constant dense<0.000000e+00> : vector<8x512xf32>
    %2 = tpu.matmul %0, %1, %cst {dimension_numbers = #tpu.dot_dimension_numbers<[1], [0], [0], [1], [0, 0, 1, 1], [], []>} : vector<8x784xbf16>, vector<784x512xbf16>, vector<8x512xf32> -> vector<8x512xf32>
    %c0_3 = arith.constant 0 : index
    %c0_4 = arith.constant 0 : index
    %3 = vector.load %arg3[%c0_3, %c0_4] : memref<1x512xf32, #tpu.memory_space<vmem>>, vector<1x512xf32>
    %4 = vector.broadcast %3 : vector<1x512xf32> to vector<8x512xf32>
    %5 = arith.addf %2, %4 : vector<8x512xf32>
    %cst_5 = arith.constant 0.000000e+00 : f32
    %6 = vector.broadcast %cst_5 : f32 to vector<8x512xf32>
    %7 = arith.maximumf %5, %6 : vector<8x512xf32>
    %8 = arith.truncf %7 : vector<8x512xf32> to vector<8x512xbf16>
    %c0_6 = arith.constant 0 : index
    %c0_7 = arith.constant 0 : index
    %9 = vector.load %arg4[%c0_6, %c0_7] : memref<512x256xbf16, #tpu.memory_space<vmem>>, vector<512x256xbf16>
    %cst_8 = arith.constant dense<0.000000e+00> : vector<8x256xf32>
    %10 = tpu.matmul %8, %9, %cst_8 {dimension_numbers = #tpu.dot_dimension_numbers<[1], [0], [0], [1], [0, 0, 1, 1], [], []>} : vector<8x512xbf16>, vector<512x256xbf16>, vector<8x256xf32> -> vector<8x256xf32>
    %c0_9 = arith.constant 0 : index
    %c0_10 = arith.constant 0 : index
    %11 = vector.load %arg5[%c0_9, %c0_10] : memref<1x256xf32, #tpu.memory_space<vmem>>, vector<1x256xf32>
    %12 = vector.broadcast %11 : vector<1x256xf32> to vector<8x256xf32>
    %13 = arith.addf %10, %12 : vector<8x256xf32>
    %cst_11 = arith.constant 0.000000e+00 : f32
    %14 = vector.broadcast %cst_11 : f32 to vector<8x256xf32>
    %15 = arith.maximumf %13, %14 : vector<8x256xf32>
    %16 = arith.truncf %15 : vector<8x256xf32> to vector<8x256xbf16>
    %c0_12 = arith.constant 0 : index
    %c0_13 = arith.constant 0 : index
    %17 = vector.load %arg6[%c0_12, %c0_13] : memref<256x128xbf16, #tpu.memory_space<vmem>>, vector<256x128xbf16>
    %cst_14 = arith.constant dense<0.000000e+00> : vector<8x128xf32>
    %18 = tpu.matmul %16, %17, %cst_14 {dimension_numbers = #tpu.dot_dimension_numbers<[1], [0], [0], [1], [0, 0, 1, 1], [], []>} : vector<8x256xbf16>, vector<256x128xbf16>, vector<8x128xf32> -> vector<8x128xf32>
    %c0_15 = arith.constant 0 : index
    %c0_16 = arith.constant 0 : index
    %19 = vector.load %arg7[%c0_15, %c0_16] : memref<1x128xf32, #tpu.memory_space<vmem>>, vector<1x128xf32>
    %20 = vector.broadcast %19 : vector<1x128xf32> to vector<8x128xf32>
    %21 = arith.addf %18, %20 : vector<8x128xf32>
    %cst_17 = arith.constant 0.000000e+00 : f32
    %22 = vector.broadcast %cst_17 : f32 to vector<8x128xf32>
    %23 = arith.maximumf %21, %22 : vector<8x128xf32>
    %24 = arith.truncf %23 : vector<8x128xf32> to vector<8x128xbf16>
    %c0_18 = arith.constant 0 : index
    %c0_19 = arith.constant 0 : index
    %25 = vector.load %arg8[%c0_18, %c0_19] : memref<128x128xbf16, #tpu.memory_space<vmem>>, vector<128x128xbf16>
    %cst_20 = arith.constant dense<0.000000e+00> : vector<8x128xf32>
    %26 = tpu.matmul %24, %25, %cst_20 {dimension_numbers = #tpu.dot_dimension_numbers<[1], [0], [0], [1], [0, 0, 1, 1], [], []>} : vector<8x128xbf16>, vector<128x128xbf16>, vector<8x128xf32> -> vector<8x128xf32>
    %c0_21 = arith.constant 0 : index
    %c0_22 = arith.constant 0 : index
    %27 = vector.load %arg9[%c0_21, %c0_22] : memref<1x128xf32, #tpu.memory_space<vmem>>, vector<1x128xf32>
    %28 = vector.broadcast %27 : vector<1x128xf32> to vector<8x128xf32>
    %29 = arith.addf %26, %28 : vector<8x128xf32>
    %cst_23 = arith.constant 0.000000e+00 : f32
    %30 = vector.broadcast %cst_23 : f32 to vector<8x128xf32>
    %31 = arith.maximumf %29, %30 : vector<8x128xf32>
    %32 = arith.truncf %31 : vector<8x128xf32> to vector<8x128xbf16>
    %c0_24 = arith.constant 0 : index
    %c0_25 = arith.constant 0 : index
    %33 = vector.load %arg10[%c0_24, %c0_25] : memref<128x128xbf16, #tpu.memory_space<vmem>>, vector<128x128xbf16>
    %cst_26 = arith.constant dense<0.000000e+00> : vector<8x128xf32>
    %34 = tpu.matmul %32, %33, %cst_26 {dimension_numbers = #tpu.dot_dimension_numbers<[1], [0], [0], [1], [0, 0, 1, 1], [], []>} : vector<8x128xbf16>, vector<128x128xbf16>, vector<8x128xf32> -> vector<8x128xf32>
    %c0_27 = arith.constant 0 : index
    %c0_28 = arith.constant 0 : index
    %35 = vector.load %arg11[%c0_27, %c0_28] : memref<1x128xf32, #tpu.memory_space<vmem>>, vector<1x128xf32>
    %36 = vector.broadcast %35 : vector<1x128xf32> to vector<8x128xf32>
    %37 = arith.addf %34, %36 : vector<8x128xf32>
    %cst_29 = arith.constant dense<0xFF800000> : vector<8xf32>
    %38 = vector.multi_reduction <maximumf>, %37, %cst_29 [1] : vector<8x128xf32> to vector<8xf32>
    %39 = vector.shape_cast %38 : vector<8xf32> to vector<8x1xf32>
    %40 = vector.broadcast %39 : vector<8x1xf32> to vector<8x128xf32>
    %41 = arith.subf %37, %40 : vector<8x128xf32>
    %42 = math.exp %41 : vector<8x128xf32>
    %cst_30 = arith.constant dense<0.000000e+00> : vector<8xf32>
    %43 = vector.multi_reduction <add>, %42, %cst_30 [1] : vector<8x128xf32> to vector<8xf32>
    %44 = vector.shape_cast %43 : vector<8xf32> to vector<8x1xf32>
    %45 = math.log %44 : vector<8x1xf32>
    %46 = vector.broadcast %45 : vector<8x1xf32> to vector<8x128xf32>
    %47 = arith.subf %41, %46 : vector<8x128xf32>
    %c0_31 = arith.constant 0 : index
    %c0_32 = arith.constant 0 : index
    %48 = vector.load %arg12[%c0_31, %c0_32] : memref<8x128xf32, #tpu.memory_space<vmem>>, vector<8x128xf32>
    tpu.vector_store %arg12[%c0_31, %c0_32], %47 {strides = array<i32>} : memref<8x128xf32, #tpu.memory_space<vmem>>, vector<8x128xf32>,
    return
  }
  func.func @transform_0(%arg0: i32) -> (i32, i32) {
    %c0_i32 = arith.constant 0 : i32
    %c0_i32_0 = arith.constant 0 : i32
    return %arg0, %c0_i32 : i32, i32
  }
  func.func @transform_1(%arg0: i32) -> (i32, i32) {
    %c0_i32 = arith.constant 0 : i32
    %c0_i32_0 = arith.constant 0 : i32
    %c0_i32_1 = arith.constant 0 : i32
    return %c0_i32, %c0_i32_0 : i32, i32
  }
  func.func @transform_2(%arg0: i32) -> (i32, i32) {
    %c0_i32 = arith.constant 0 : i32
    %c0_i32_0 = arith.constant 0 : i32
    %c0_i32_1 = arith.constant 0 : i32
    return %c0_i32, %c0_i32_0 : i32, i32
  }
  func.func @transform_3(%arg0: i32) -> (i32, i32) {
    %c0_i32 = arith.constant 0 : i32
    %c0_i32_0 = arith.constant 0 : i32
    %c0_i32_1 = arith.constant 0 : i32
    return %c0_i32, %c0_i32_0 : i32, i32
  }
  func.func @transform_4(%arg0: i32) -> (i32, i32) {
    %c0_i32 = arith.constant 0 : i32
    %c0_i32_0 = arith.constant 0 : i32
    %c0_i32_1 = arith.constant 0 : i32
    return %c0_i32, %c0_i32_0 : i32, i32
  }
  func.func @transform_5(%arg0: i32) -> (i32, i32) {
    %c0_i32 = arith.constant 0 : i32
    %c0_i32_0 = arith.constant 0 : i32
    %c0_i32_1 = arith.constant 0 : i32
    return %c0_i32, %c0_i32_0 : i32, i32
  }
  func.func @transform_6(%arg0: i32) -> (i32, i32) {
    %c0_i32 = arith.constant 0 : i32
    %c0_i32_0 = arith.constant 0 : i32
    %c0_i32_1 = arith.constant 0 : i32
    return %c0_i32, %c0_i32_0 : i32, i32
  }
  func.func @transform_7(%arg0: i32) -> (i32, i32) {
    %c0_i32 = arith.constant 0 : i32
    %c0_i32_0 = arith.constant 0 : i32
    %c0_i32_1 = arith.constant 0 : i32
    return %c0_i32, %c0_i32_0 : i32, i32
  }
  func.func @transform_8(%arg0: i32) -> (i32, i32) {
    %c0_i32 = arith.constant 0 : i32
    %c0_i32_0 = arith.constant 0 : i32
    %c0_i32_1 = arith.constant 0 : i32
    return %c0_i32, %c0_i32_0 : i32, i32
  }
  func.func @transform_9(%arg0: i32) -> (i32, i32) {
    %c0_i32 = arith.constant 0 : i32
    %c0_i32_0 = arith.constant 0 : i32
    %c0_i32_1 = arith.constant 0 : i32
    return %c0_i32, %c0_i32_0 : i32, i32
  }
  func.func @transform_10(%arg0: i32) -> (i32, i32) {
    %c0_i32 = arith.constant 0 : i32
    %c0_i32_0 = arith.constant 0 : i32
    %c0_i32_1 = arith.constant 0 : i32
    return %c0_i32, %c0_i32_0 : i32, i32
  }
  func.func @transform_11(%arg0: i32) -> (i32, i32) {
    %c0_i32 = arith.constant 0 : i32
    %c0_i32_0 = arith.constant 0 : i32
    return %arg0, %c0_i32 : i32, i32
  }
}

</mosaic_0001>

<llo_original>
// kernel: mlp_forward.1
$region0: #{mlp_forward.1}
  #allocation0 [shape = 'u32[]', space=smem, size = 0x4, offset = 0x4, fixed_abs, tag = 'smem constant byte address 0x4 - core index']
  #allocation1 [shape = 'u32[144,128]{1,0:T(1,128)}', space=vmem, size = 0x12000, scoped, tag = 'internal scratch']
  %s0 = inlined_call_operand.vmem [shape: bf16[8,784], index: 0, kind: input, shape index: {}]
  %s1 = inlined_call_operand.hbm [shape: bf16[784,512], index: 1, kind: input, shape index: {}]
  %s2 = inlined_call_operand.vmem [shape: f32[1,512], index: 2, kind: input, shape index: {}]
  %s3 = inlined_call_operand.vmem [shape: bf16[512,256], index: 3, kind: input, shape index: {}]
  %s4 = inlined_call_operand.vmem [shape: f32[1,256], index: 4, kind: input, shape index: {}]
  %s5 = inlined_call_operand.hbm [shape: bf16[256,128], index: 5, kind: input, shape index: {}]
  %s6 = inlined_call_operand.vmem [shape: f32[1,128], index: 6, kind: input, shape index: {}]
  %s7 = inlined_call_operand.hbm [shape: bf16[128,128], index: 7, kind: input, shape index: {}]
  %s8 = inlined_call_operand.vmem [shape: f32[1,128], index: 8, kind: input, shape index: {}]
  %s9 = inlined_call_operand.hbm [shape: bf16[128,128], index: 9, kind: input, shape index: {}]
  %s10 = inlined_call_operand.vmem [shape: f32[1,128], index: 10, kind: input, shape index: {}]
  %s11 = inlined_call_operand.hbm [shape: f32[8,128], index: 11, kind: output, shape index: {}]
  %s12 = sld [smem:[#allocation0]]
  $region70: #{mlp_forward.1} parent=0
    _
  %s14 = ssub.s32 1, %s12
  %s15 = scalar_select 0, %s14, %s12
  $region1: #{mlp_forward.1} parent=0
    #allocation2 [shape = 'u8[802816]{0}', space=vmem, size = 0xc4000, scoped, tag = 'input window, operand 1, single buffered']
    #allocation3 [shape = 's32[1]{0}', space=sflag, size = 0x4, scoped, tag = 'scoped memory for mlp_forward.1']
    #allocation4 [shape = 's32[1]{0}', space=sflag, size = 0x4, scoped, tag = 'scoped memory for mlp_forward.1']
    #allocation5 [shape = 'u8[65536]{0}', space=vmem, size = 0x10000, scoped, tag = 'input window, operand 5, single buffered']
    #allocation6 [shape = 's32[1]{0}', space=sflag, size = 0x4, scoped, tag = 'scoped memory for mlp_forward.1']
    #allocation7 [shape = 'u8[32768]{0}', space=vmem, size = 0x8000, scoped, tag = 'input window, operand 7, single buffered']
    #allocation8 [shape = 'u8[32768]{0}', space=vmem, size = 0x8000, scoped, tag = 'input window, operand 9, single buffered']
    #allocation9 [shape = 's32[1]{0}', space=sflag, size = 0x4, scoped, tag = 'scoped memory for mlp_forward.1']
    #allocation10 [shape = 'u8[4096]{0}', space=vmem, size = 0x1000, scoped, tag = 'output window, operand 0, single buffered']
    %16 = vsyncpa [#allocation3], 0
    %17 = vsyncpa [#allocation6], 0
    %18 = vsyncpa [#allocation9], 0
    %19 = vsyncpa [#allocation4], 0
    // Predicated region
    $region2: #{mlp_forward.1} parent=1 // pred_check
      _
    $region3: #{mlp_forward.1} parent=1 // pred_check_branch
      %21 = sbr.rel (0) target = $region5
    $region4: #{mlp_forward.1} parent=1 // pred_region
      _
    $region5: #{mlp_forward.1} parent=1 // pred_fallthru
      _
    // Predicated region
    $region6: #{mlp_forward.1} parent=1 // pred_check
      _
    $region7: #{mlp_forward.1} parent=1 // pred_check_branch
      %23 = sbr.rel (0) target = $region9
    $region8: #{mlp_forward.1} parent=1 // pred_region
      %s25 = ssub.s32 25088, 25088
      %26 = vsyncadd [#allocation3], %s25
      %s27 = sshll.u32 [#allocation2], 4
      %s28 = int_to_ptr.vmem [resolvable:$true] %s27
      %33 = dma.hbm_to_vmem [thread:$0]  %s1, 25088, %s28, [#allocation3], 256, 256, 16
    $region9: #{mlp_forward.1} parent=1 // pred_fallthru
      _
    // Predicated region
    $region10: #{mlp_forward.1} parent=1 // pred_check
      _
    $region11: #{mlp_forward.1} parent=1 // pred_check_branch
      %35 = sbr.rel (0) target = $region13
    $region12: #{mlp_forward.1} parent=1 // pred_region
      _
    $region13: #{mlp_forward.1} parent=1 // pred_fallthru
      _
    // Predicated region
    $region14: #{mlp_forward.1} parent=1 // pred_check
      _
    $region15: #{mlp_forward.1} parent=1 // pred_check_branch
      %37 = sbr.rel (0) target = $region17
    $region16: #{mlp_forward.1} parent=1 // pred_region
      _
    $region17: #{mlp_forward.1} parent=1 // pred_fallthru
      _
    // Predicated region
    $region18: #{mlp_forward.1} parent=1 // pred_check
      _
    $region19: #{mlp_forward.1} parent=1 // pred_check_branch
      %39 = sbr.rel (0) target = $region21
    $region20: #{mlp_forward.1} parent=1 // pred_region
      _
    $region21: #{mlp_forward.1} parent=1 // pred_fallthru
      _
    // Predicated region
    $region22: #{mlp_forward.1} parent=1 // pred_check
      _
    $region23: #{mlp_forward.1} parent=1 // pred_check_branch
      %41 = sbr.rel (0) target = $region25
    $region24: #{mlp_forward.1} parent=1 // pred_region
      %s43 = ssub.s32 2048, 2048
      %44 = vsyncadd [#allocation6], %s43
      %s45 = sshll.u32 [#allocation5], 4
      %s46 = int_to_ptr.vmem [resolvable:$true] %s45
      %51 = dma.hbm_to_vmem [thread:$0]  %s5, 2048, %s46, [#allocation6], 64, 64, 4
    $region25: #{mlp_forward.1} parent=1 // pred_fallthru
      _
    // Predicated region
    $region26: #{mlp_forward.1} parent=1 // pred_check
      _
    $region27: #{mlp_forward.1} parent=1 // pred_check_branch
      %53 = sbr.rel (0) target = $region29
    $region28: #{mlp_forward.1} parent=1 // pred_region
      _
    $region29: #{mlp_forward.1} parent=1 // pred_fallthru
      _
    // Predicated region
    $region30: #{mlp_forward.1} parent=1 // pred_check
      _
    $region31: #{mlp_forward.1} parent=1 // pred_check_branch
      %55 = sbr.rel (0) target = $region33
    $region32: #{mlp_forward.1} parent=1 // pred_region
      %s57 = ssub.s32 1024, 1024
      %58 = vsyncadd [#allocation6], %s57
      %s59 = sshll.u32 [#allocation7], 4
      %s60 = int_to_ptr.vmem [resolvable:$true] %s59
      %65 = dma.hbm_to_vmem [thread:$0]  %s7, 1024, %s60, [#allocation6], 64, 64, 4
    $region33: #{mlp_forward.1} parent=1 // pred_fallthru
      _
    // Predicated region
    $region34: #{mlp_forward.1} parent=1 // pred_check
      _
    $region35: #{mlp_forward.1} parent=1 // pred_check_branch
      %67 = sbr.rel (0) target = $region37
    $region36: #{mlp_forward.1} parent=1 // pred_region
      _
    $region37: #{mlp_forward.1} parent=1 // pred_fallthru
      _
    // Predicated region
    $region38: #{mlp_forward.1} parent=1 // pred_check
      _
    $region39: #{mlp_forward.1} parent=1 // pred_check_branch
      %69 = sbr.rel (0) target = $region41
    $region40: #{mlp_forward.1} parent=1 // pred_region
      %s71 = ssub.s32 1024, 1024
      %72 = vsyncadd [#allocation9], %s71
      %s73 = sshll.u32 [#allocation8], 4
      %s74 = int_to_ptr.vmem [resolvable:$true] %s73
      %79 = dma.hbm_to_vmem [thread:$0]  %s9, 1024, %s74, [#allocation9], 64, 64, 4
    $region41: #{mlp_forward.1} parent=1 // pred_fallthru
      _
    // Predicated region
    $region42: #{mlp_forward.1} parent=1 // pred_check
      _
    $region43: #{mlp_forward.1} parent=1 // pred_check_branch
      %81 = sbr.rel (0) target = $region45
    $region44: #{mlp_forward.1} parent=1 // pred_region
      _
    $region45: #{mlp_forward.1} parent=1 // pred_fallthru
      _
    // Predicated region
    $region46: #{mlp_forward.1} parent=1 // pred_check
      _
    $region47: #{mlp_forward.1} parent=1 // pred_check_branch
      %83 = sbr.rel (0) target = $region49
    $region48: #{mlp_forward.1} parent=1 // pred_region
      %84 = dma.done [#allocation3], 25088
    $region49: #{mlp_forward.1} parent=1 // pred_fallthru
      _
    // Predicated region
    $region50: #{mlp_forward.1} parent=1 // pred_check
      _
    $region51: #{mlp_forward.1} parent=1 // pred_check_branch
      %86 = sbr.rel (0) target = $region53
    $region52: #{mlp_forward.1} parent=1 // pred_region
      %87 = dma.done [#allocation6], 2048
    $region53: #{mlp_forward.1} parent=1 // pred_fallthru
      _
    // Predicated region
    $region54: #{mlp_forward.1} parent=1 // pred_check
      _
    $region55: #{mlp_forward.1} parent=1 // pred_check_branch
      %89 = sbr.rel (0) target = $region57
    $region56: #{mlp_forward.1} parent=1 // pred_region
      %90 = dma.done [#allocation6], 1024
    $region57: #{mlp_forward.1} parent=1 // pred_fallthru
      _
    // Predicated region
    $region58: #{mlp_forward.1} parent=1 // pred_check
      _
    $region59: #{mlp_forward.1} parent=1 // pred_check_branch
      %92 = sbr.rel (0) target = $region61
    $region60: #{mlp_forward.1} parent=1 // pred_region
      %93 = dma.done [#allocation9], 1024
    $region61: #{mlp_forward.1} parent=1 // pred_fallthru
      _
    %v95 = vld [vmem:[%s0] sm:$0xff]
    %v96 = vld [vmem:[%s0 + $0x8] sm:$0xff]
    %v97 = vld [vmem:[%s0 + $0x10] sm:$0xff]
    %v98 = vld [vmem:[%s0 + $0x18] sm:$0xf]
    %v99 = vld [vmem:[#allocation2] sm:$0xff]
    %v100 = vld [vmem:[#allocation2 + $0x8] sm:$0xff]
    %v101 = vld [vmem:[#allocation2 + $0x10] sm:$0xff]
    %v102 = vld [vmem:[#allocation2 + $0x18] sm:$0xff]
    %v103 = vld [vmem:[#allocation2 + $0x20] sm:$0xff]
    %v104 = vld [vmem:[#allocation2 + $0x28] sm:$0xff]
    %v105 = vld [vmem:[#allocation2 + $0x30] sm:$0xff]
    %v106 = vld [vmem:[#allocation2 + $0x38] sm:$0xff]
    %v107 = vld [vmem:[#allocation2 + $0x40] sm:$0xff]
    %v108 = vld [vmem:[#allocation2 + $0x48] sm:$0xff]
    %v109 = vld [vmem:[#allocation2 + $0x50] sm:$0xff]
    %v110 = vld [vmem:[#allocation2 + $0x58] sm:$0xff]
    %v111 = vld [vmem:[#allocation2 + $0x60] sm:$0xff]
    %v112 = vld [vmem:[#allocation2 + $0x68] sm:$0xff]
    %v113 = vld [vmem:[#allocation2 + $0x70] sm:$0xff]
    %v114 = vld [vmem:[#allocation2 + $0x78] sm:$0xff]
    %v115 = vld [vmem:[#allocation2 + $0x80] sm:$0xff]
    %v116 = vld [vmem:[#allocation2 + $0x88] sm:$0xff]
    %v117 = vld [vmem:[#allocation2 + $0x90] sm:$0xff]
    %v118 = vld [vmem:[#allocation2 + $0x98] sm:$0xff]
    %v119 = vld [vmem:[#allocation2 + $0xa0] sm:$0xff]
    %v120 = vld [vmem:[#allocation2 + $0xa8] sm:$0xff]
    %v121 = vld [vmem:[#allocation2 + $0xb0] sm:$0xff]
    %v122 = vld [vmem:[#allocation2 + $0xb8] sm:$0xff]
    %v123 = vld [vmem:[#allocation2 + $0xc0] sm:$0xff]
    %v124 = vld [vmem:[#allocation2 + $0xc8] sm:$0xff]
    %v125 = vld [vmem:[#allocation2 + $0xd0] sm:$0xff]
    %v126 = vld [vmem:[#allocation2 + $0xd8] sm:$0xff]
    %v127 = vld [vmem:[#allocation2 + $0xe0] sm:$0xff]
    %v128 = vld [vmem:[#allocation2 + $0xe8] sm:$0xff]
    %v129 = vld [vmem:[#allocation2 + $0xf0] sm:$0xff]
    %v130 = vld [vmem:[#allocation2 + $0xf8] sm:$0xff]
    %v131 = vld [vmem:[#allocation2 + $0x100] sm:$0xff]
    %v132 = vld [vmem:[#allocation2 + $0x108] sm:$0xff]
    %v133 = vld [vmem:[#allocation2 + $0x110] sm:$0xff]
    %v134 = vld [vmem:[#allocation2 + $0x118] sm:$0xff]
    %v135 = vld [vmem:[#allocation2 + $0x120] sm:$0xff]
    %v136 = vld [vmem:[#allocation2 + $0x128] sm:$0xff]
    %v137 = vld [vmem:[#allocation2 + $0x130] sm:$0xff]
    %v138 = vld [vmem:[#allocation2 + $0x138] sm:$0xff]
    %v139 = vld [vmem:[#allocation2 + $0x140] sm:$0xff]
    %v140 = vld [vmem:[#allocation2 + $0x148] sm:$0xff]
    %v141 = vld [vmem:[#allocation2 + $0x150] sm:$0xff]
    %v142 = vld [vmem:[#allocation2 + $0x158] sm:$0xff]
    %v143 = vld [vmem:[#allocation2 + $0x160] sm:$0xff]
    %v144 = vld [vmem:[#allocation2 + $0x168] sm:$0xff]
    %v145 = vld [vmem:[#allocation2 + $0x170] sm:$0xff]
    %v146 = vld [vmem:[#allocation2 + $0x178] sm:$0xff]
    %v147 = vld [vmem:[#allocation2 + $0x180] sm:$0xff]
    %v148 = vld [vmem:[#allocation2 + $0x188] sm:$0xff]
    %v149 = vld [vmem:[#allocation2 + $0x190] sm:$0xff]
    %v150 = vld [vmem:[#allocation2 + $0x198] sm:$0xff]
    %v151 = vld [vmem:[#allocation2 + $0x1a0] sm:$0xff]
    %v152 = vld [vmem:[#allocation2 + $0x1a8] sm:$0xff]
    %v153 = vld [vmem:[#allocation2 + $0x1b0] sm:$0xff]
    %v154 = vld [vmem:[#allocation2 + $0x1b8] sm:$0xff]
    %v155 = vld [vmem:[#allocation2 + $0x1c0] sm:$0xff]
    %v156 = vld [vmem:[#allocation2 + $0x1c8] sm:$0xff]
    %v157 = vld [vmem:[#allocation2 + $0x1d0] sm:$0xff]
    %v158 = vld [vmem:[#allocation2 + $0x1d8] sm:$0xff]
    %v159 = vld [vmem:[#allocation2 + $0x1e0] sm:$0xff]
    %v160 = vld [vmem:[#allocation2 + $0x1e8] sm:$0xff]
    %v161 = vld [vmem:[#allocation2 + $0x1f0] sm:$0xff]
    %v162 = vld [vmem:[#allocation2 + $0x1f8] sm:$0xff]
    %v163 = vld [vmem:[#allocation2 + $0x200] sm:$0xff]
    %v164 = vld [vmem:[#allocation2 + $0x208] sm:$0xff]
    %v165 = vld [vmem:[#allocation2 + $0x210] sm:$0xff]
    %v166 = vld [vmem:[#allocation2 + $0x218] sm:$0xff]
    %v167 = vld [vmem:[#allocation2 + $0x220] sm:$0xff]
    %v168 = vld [vmem:[#allocation2 + $0x228] sm:$0xff]
    %v169 = vld [vmem:[#allocation2 + $0x230] sm:$0xff]
    %v170 = vld [vmem:[#allocation2 + $0x238] sm:$0xff]
    %v171 = vld [vmem:[#allocation2 + $0x240] sm:$0xff]
    %v172 = vld [vmem:[#allocation2 + $0x248] sm:$0xff]
    %v173 = vld [vmem:[#allocation2 + $0x250] sm:$0xff]
    %v174 = vld [vmem:[#allocation2 + $0x258] sm:$0xff]
    %v175 = vld [vmem:[#allocation2 + $0x260] sm:$0xff]
    %v176 = vld [vmem:[#allocation2 + $0x268] sm:$0xff]
    %v177 = vld [vmem:[#allocation2 + $0x270] sm:$0xff]
    %v178 = vld [vmem:[#allocation2 + $0x278] sm:$0xff]
    %v179 = vld [vmem:[#allocation2 + $0x280] sm:$0xff]
    %v180 = vld [vmem:[#allocation2 + $0x288] sm:$0xff]
    %v181 = vld [vmem:[#allocation2 + $0x290] sm:$0xff]
    %v182 = vld [vmem:[#allocation2 + $0x298] sm:$0xff]
    %v183 = vld [vmem:[#allocation2 + $0x2a0] sm:$0xff]
    %v184 = vld [vmem:[#allocation2 + $0x2a8] sm:$0xff]
    %v185 = vld [vmem:[#allocation2 + $0x2b0] sm:$0xff]
    %v186 = vld [vmem:[#allocation2 + $0x2b8] sm:$0xff]
    %v187 = vld [vmem:[#allocation2 + $0x2c0] sm:$0xff]
    %v188 = vld [vmem:[#allocation2 + $0x2c8] sm:$0xff]
    %v189 = vld [vmem:[#allocation2 + $0x2d0] sm:$0xff]
    %v190 = vld [vmem:[#allocation2 + $0x2d8] sm:$0xff]
    %v191 = vld [vmem:[#allocation2 + $0x2e0] sm:$0xff]
    %v192 = vld [vmem:[#allocation2 + $0x2e8] sm:$0xff]
    %v193 = vld [vmem:[#allocation2 + $0x2f0] sm:$0xff]
    %v194 = vld [vmem:[#allocation2 + $0x2f8] sm:$0xff]
    %v195 = vld [vmem:[#allocation2 + $0x300] sm:$0xff]
    %v196 = vld [vmem:[#allocation2 + $0x308] sm:$0xff]
    %v197 = vld [vmem:[#allocation2 + $0x310] sm:$0xff]
    %v198 = vld [vmem:[#allocation2 + $0x318] sm:$0xff]
    %v199 = vld [vmem:[#allocation2 + $0x320] sm:$0xff]
    %v200 = vld [vmem:[#allocation2 + $0x328] sm:$0xff]
    %v201 = vld [vmem:[#allocation2 + $0x330] sm:$0xff]
    %v202 = vld [vmem:[#allocation2 + $0x338] sm:$0xff]
    %v203 = vld [vmem:[#allocation2 + $0x340] sm:$0xff]
    %v204 = vld [vmem:[#allocation2 + $0x348] sm:$0xff]
    %v205 = vld [vmem:[#allocation2 + $0x350] sm:$0xff]
    %v206 = vld [vmem:[#allocation2 + $0x358] sm:$0xff]
    %v207 = vld [vmem:[#allocation2 + $0x360] sm:$0xff]
    %v208 = vld [vmem:[#allocation2 + $0x368] sm:$0xff]
    %v209 = vld [vmem:[#allocation2 + $0x370] sm:$0xff]
    %v210 = vld [vmem:[#allocation2 + $0x378] sm:$0xff]
    %v211 = vld [vmem:[#allocation2 + $0x380] sm:$0xff]
    %v212 = vld [vmem:[#allocation2 + $0x388] sm:$0xff]
    %v213 = vld [vmem:[#allocation2 + $0x390] sm:$0xff]
    %v214 = vld [vmem:[#allocation2 + $0x398] sm:$0xff]
    %v215 = vld [vmem:[#allocation2 + $0x3a0] sm:$0xff]
    %v216 = vld [vmem:[#allocation2 + $0x3a8] sm:$0xff]
    %v217 = vld [vmem:[#allocation2 + $0x3b0] sm:$0xff]
    %v218 = vld [vmem:[#allocation2 + $0x3b8] sm:$0xff]
    %v219 = vld [vmem:[#allocation2 + $0x3c0] sm:$0xff]
    %v220 = vld [vmem:[#allocation2 + $0x3c8] sm:$0xff]
    %v221 = vld [vmem:[#allocation2 + $0x3d0] sm:$0xff]
    %v222 = vld [vmem:[#allocation2 + $0x3d8] sm:$0xff]
    %v223 = vld [vmem:[#allocation2 + $0x3e0] sm:$0xff]
    %v224 = vld [vmem:[#allocation2 + $0x3e8] sm:$0xff]
    %v225 = vld [vmem:[#allocation2 + $0x3f0] sm:$0xff]
    %v226 = vld [vmem:[#allocation2 + $0x3f8] sm:$0xff]
    %v227 = vld [vmem:[#allocation2 + $0x400] sm:$0xff]
    %v228 = vld [vmem:[#allocation2 + $0x408] sm:$0xff]
    %v229 = vld [vmem:[#allocation2 + $0x410] sm:$0xff]
    %v230 = vld [vmem:[#allocation2 + $0x418] sm:$0xff]
    %v231 = vld [vmem:[#allocation2 + $0x420] sm:$0xff]
    %v232 = vld [vmem:[#allocation2 + $0x428] sm:$0xff]
    %v233 = vld [vmem:[#allocation2 + $0x430] sm:$0xff]
    %v234 = vld [vmem:[#allocation2 + $0x438] sm:$0xff]
    %v235 = vld [vmem:[#allocation2 + $0x440] sm:$0xff]
    %v236 = vld [vmem:[#allocation2 + $0x448] sm:$0xff]
    %v237 = vld [vmem:[#allocation2 + $0x450] sm:$0xff]
    %v238 = vld [vmem:[#allocation2 + $0x458] sm:$0xff]
    %v239 = vld [vmem:[#allocation2 + $0x460] sm:$0xff]
    %v240 = vld [vmem:[#allocation2 + $0x468] sm:$0xff]
    %v241 = vld [vmem:[#allocation2 + $0x470] sm:$0xff]
    %v242 = vld [vmem:[#allocation2 + $0x478] sm:$0xff]
    %v243 = vld [vmem:[#allocation2 + $0x480] sm:$0xff]
    %v244 = vld [vmem:[#allocation2 + $0x488] sm:$0xff]
    %v245 = vld [vmem:[#allocation2 + $0x490] sm:$0xff]
    %v246 = vld [vmem:[#allocation2 + $0x498] sm:$0xff]
    %v247 = vld [vmem:[#allocation2 + $0x4a0] sm:$0xff]
    %v248 = vld [vmem:[#allocation2 + $0x4a8] sm:$0xff]
    %v249 = vld [vmem:[#allocation2 + $0x4b0] sm:$0xff]
    %v250 = vld [vmem:[#allocation2 + $0x4b8] sm:$0xff]
    %v251 = vld [vmem:[#allocation2 + $0x4c0] sm:$0xff]
    %v252 = vld [vmem:[#allocation2 + $0x4c8] sm:$0xff]
    %v253 = vld [vmem:[#allocation2 + $0x4d0] sm:$0xff]
    %v254 = vld [vmem:[#allocation2 + $0x4d8] sm:$0xff]
    %v255 = vld [vmem:[#allocation2 + $0x4e0] sm:$0xff]
    %v256 = vld [vmem:[#allocation2 + $0x4e8] sm:$0xff]
    %v257 = vld [vmem:[#allocation2 + $0x4f0] sm:$0xff]
    %v258 = vld [vmem:[#allocation2 + $0x4f8] sm:$0xff]
    %v259 = vld [vmem:[#allocation2 + $0x500] sm:$0xff]
    %v260 = vld [vmem:[#allocation2 + $0x508] sm:$0xff]
    %v261 = vld [vmem:[#allocation2 + $0x510] sm:$0xff]
    %v262 = vld [vmem:[#allocation2 + $0x518] sm:$0xff]
    %v263 = vld [vmem:[#allocation2 + $0x520] sm:$0xff]
    %v264 = vld [vmem:[#allocation2 + $0x528] sm:$0xff]
    %v265 = vld [vmem:[#allocation2 + $0x530] sm:$0xff]
    %v266 = vld [vmem:[#allocation2 + $0x538] sm:$0xff]
    %v267 = vld [vmem:[#allocation2 + $0x540] sm:$0xff]
    %v268 = vld [vmem:[#allocation2 + $0x548] sm:$0xff]
    %v269 = vld [vmem:[#allocation2 + $0x550] sm:$0xff]
    %v270 = vld [vmem:[#allocation2 + $0x558] sm:$0xff]
    %v271 = vld [vmem:[#allocation2 + $0x560] sm:$0xff]
    %v272 = vld [vmem:[#allocation2 + $0x568] sm:$0xff]
    %v273 = vld [vmem:[#allocation2 + $0x570] sm:$0xff]
    %v274 = vld [vmem:[#allocation2 + $0x578] sm:$0xff]
    %v275 = vld [vmem:[#allocation2 + $0x580] sm:$0xff]
    %v276 = vld [vmem:[#allocation2 + $0x588] sm:$0xff]
    %v277 = vld [vmem:[#allocation2 + $0x590] sm:$0xff]
    %v278 = vld [vmem:[#allocation2 + $0x598] sm:$0xff]
    %v279 = vld [vmem:[#allocation2 + $0x5a0] sm:$0xff]
    %v280 = vld [vmem:[#allocation2 + $0x5a8] sm:$0xff]
    %v281 = vld [vmem:[#allocation2 + $0x5b0] sm:$0xff]
    %v282 = vld [vmem:[#allocation2 + $0x5b8] sm:$0xff]
    %v283 = vld [vmem:[#allocation2 + $0x5c0] sm:$0xff]
    %v284 = vld [vmem:[#allocation2 + $0x5c8] sm:$0xff]
    %v285 = vld [vmem:[#allocation2 + $0x5d0] sm:$0xff]
    %v286 = vld [vmem:[#allocation2 + $0x5d8] sm:$0xff]
    %v287 = vld [vmem:[#allocation2 + $0x5e0] sm:$0xff]
    %v288 = vld [vmem:[#allocation2 + $0x5e8] sm:$0xff]
    %v289 = vld [vmem:[#allocation2 + $0x5f0] sm:$0xff]
    %v290 = vld [vmem:[#allocation2 + $0x5f8] sm:$0xff]
    %v291 = vld [vmem:[#allocation2 + $0x600] sm:$0xff]
    %v292 = vld [vmem:[#allocation2 + $0x608] sm:$0xff]
    %v293 = vld [vmem:[#allocation2 + $0x610] sm:$0xff]
    %v294 = vld [vmem:[#allocation2 + $0x618] sm:$0xff]
    %v295 = vld [vmem:[%s2] sm:$0xf]
    %v297 = vlaneseq
    %v298 = vshrl.u32 %v297, 7
    %v299 = vsub.s32 0, %v298
    %v300 = vrot.slane %v295, %v299
    %v301 = vlaneseq
    %v302 = vshrl.u32 %v301, 7
    %v303 = vsub.s32 1, %v302
    %v304 = vrot.slane %v295, %v303
    %v305 = vlaneseq
    %v306 = vshrl.u32 %v305, 7
    %v307 = vsub.s32 2, %v306
    %v308 = vrot.slane %v295, %v307
    %v309 = vlaneseq
    %v310 = vshrl.u32 %v309, 7
    %v311 = vsub.s32 3, %v310
    %v312 = vrot.slane %v295, %v311
    %v321 = vunpack.c.l.b16 %v95
    %v322 = vunpack.c.h.b16 %v95
    %v323 = vunpack.c.l.b16 %v96
    %v324 = vunpack.c.h.b16 %v96
    %v325 = vunpack.c.l.b16 %v97
    %v326 = vunpack.c.h.b16 %v97
    %v327 = vunpack.c.l.b16 %v98
    %v328 = vpack.c.b16 %v321, %v321
    %v329 = vpack.c.b16 %v322, %v322
    %v330 = vpack.c.b16 %v323, %v323
    %v331 = vpack.c.b16 %v324, %v324
    %v332 = vpack.c.b16 %v325, %v325
    %v333 = vpack.c.b16 %v326, %v326
    %v334 = vpack.c.b16 %v327, %v327
    %v537 = vunpack.c.l.b16 %v99
    %v538 = vunpack.c.h.b16 %v99
    %v539 = vunpack.c.l.b16 %v100
    %v540 = vunpack.c.h.b16 %v100
    %v541 = vunpack.c.l.b16 %v101
    %v542 = vunpack.c.h.b16 %v101
    %v543 = vunpack.c.l.b16 %v102
    %v544 = vunpack.c.h.b16 %v102
    %v545 = vunpack.c.l.b16 %v103
    %v546 = vunpack.c.h.b16 %v103
    %v547 = vunpack.c.l.b16 %v104
    %v548 = vunpack.c.h.b16 %v104
    %v549 = vunpack.c.l.b16 %v105
    %v550 = vunpack.c.h.b16 %v105
    %v551 = vunpack.c.l.b16 %v106
    %v552 = vunpack.c.h.b16 %v106
    %v553 = vunpack.c.l.b16 %v107
    %v554 = vunpack.c.h.b16 %v107
    %v555 = vunpack.c.l.b16 %v108
    %v556 = vunpack.c.h.b16 %v108
    %v557 = vunpack.c.l.b16 %v109
    %v558 = vunpack.c.h.b16 %v109
    %v559 = vunpack.c.l.b16 %v110
    %v560 = vunpack.c.h.b16 %v110
    %v561 = vunpack.c.l.b16 %v111
    %v562 = vunpack.c.h.b16 %v111
    %v563 = vunpack.c.l.b16 %v112
    %v564 = vunpack.c.h.b16 %v112
    %v565 = vunpack.c.l.b16 %v113
    %v566 = vunpack.c.h.b16 %v113
    %v567 = vunpack.c.l.b16 %v114
    %v568 = vunpack.c.h.b16 %v114
    %v569 = vunpack.c.l.b16 %v115
    %v570 = vunpack.c.h.b16 %v115
    %v571 = vunpack.c.l.b16 %v116
    %v572 = vunpack.c.h.b16 %v116
    %v573 = vunpack.c.l.b16 %v117
    %v574 = vunpack.c.h.b16 %v117
    %v575 = vunpack.c.l.b16 %v118
    %v576 = vunpack.c.h.b16 %v118
    %v577 = vunpack.c.l.b16 %v119
    %v578 = vunpack.c.h.b16 %v119
    %v579 = vunpack.c.l.b16 %v120
    %v580 = vunpack.c.h.b16 %v120
    %v581 = vunpack.c.l.b16 %v121
    %v582 = vunpack.c.h.b16 %v121
    %v583 = vunpack.c.l.b16 %v122
    %v584 = vunpack.c.h.b16 %v122
    %v585 = vunpack.c.l.b16 %v123
    %v586 = vunpack.c.h.b16 %v123
    %v587 = vunpack.c.l.b16 %v124
    %v588 = vunpack.c.h.b16 %v124
    %v589 = vunpack.c.l.b16 %v125
    %v590 = vunpack.c.h.b16 %v125
    %v591 = vunpack.c.l.b16 %v126
    %v592 = vunpack.c.h.b16 %v126
    %v593 = vunpack.c.l.b16 %v127
    %v594 = vunpack.c.h.b16 %v127
    %v595 = vunpack.c.l.b16 %v128
    %v596 = vunpack.c.h.b16 %v128
    %v597 = vunpack.c.l.b16 %v129
    %v598 = vunpack.c.h.b16 %v129
    %v599 = vunpack.c.l.b16 %v130
    %v600 = vunpack.c.h.b16 %v130
    %v601 = vunpack.c.l.b16 %v131
    %v602 = vunpack.c.h.b16 %v131
    %v603 = vunpack.c.l.b16 %v132
    %v604 = vunpack.c.h.b16 %v132
    %v605 = vunpack.c.l.b16 %v133
    %v606 = vunpack.c.h.b16 %v133
    %v607 = vunpack.c.l.b16 %v134
    %v608 = vunpack.c.h.b16 %v134
    %v609 = vunpack.c.l.b16 %v135
    %v610 = vunpack.c.h.b16 %v135
    %v611 = vunpack.c.l.b16 %v136
    %v612 = vunpack.c.h.b16 %v136
    %v613 = vunpack.c.l.b16 %v137
    %v614 = vunpack.c.h.b16 %v137
    %v615 = vunpack.c.l.b16 %v138
    %v616 = vunpack.c.h.b16 %v138
    %v617 = vunpack.c.l.b16 %v139
    %v618 = vunpack.c.h.b16 %v139
    %v619 = vunpack.c.l.b16 %v140
    %v620 = vunpack.c.h.b16 %v140
    %v621 = vunpack.c.l.b16 %v141
    %v622 = vunpack.c.h.b16 %v141
    %v623 = vunpack.c.l.b16 %v142
    %v624 = vunpack.c.h.b16 %v142
    %v625 = vunpack.c.l.b16 %v143
    %v626 = vunpack.c.h.b16 %v143
    %v627 = vunpack.c.l.b16 %v144
    %v628 = vunpack.c.h.b16 %v144
    %v629 = vunpack.c.l.b16 %v145
    %v630 = vunpack.c.h.b16 %v145
    %v631 = vunpack.c.l.b16 %v146
    %v632 = vunpack.c.h.b16 %v146
    %v633 = vunpack.c.l.b16 %v147
    %v634 = vunpack.c.h.b16 %v147
    %v635 = vunpack.c.l.b16 %v148
    %v636 = vunpack.c.h.b16 %v148
    %v637 = vunpack.c.l.b16 %v149
    %v638 = vunpack.c.h.b16 %v149
    %v639 = vunpack.c.l.b16 %v150
    %v640 = vunpack.c.h.b16 %v150
    %v641 = vunpack.c.l.b16 %v151
    %v642 = vunpack.c.h.b16 %v151
    %v643 = vunpack.c.l.b16 %v152
    %v644 = vunpack.c.h.b16 %v152
    %v645 = vunpack.c.l.b16 %v153
    %v646 = vunpack.c.h.b16 %v153
    %v647 = vunpack.c.l.b16 %v154
    %v648 = vunpack.c.h.b16 %v154
    %v649 = vunpack.c.l.b16 %v155
    %v650 = vunpack.c.h.b16 %v155
    %v651 = vunpack.c.l.b16 %v156
    %v652 = vunpack.c.h.b16 %v156
    %v653 = vunpack.c.l.b16 %v157
    %v654 = vunpack.c.h.b16 %v157
    %v655 = vunpack.c.l.b16 %v158
    %v656 = vunpack.c.h.b16 %v158
    %v657 = vunpack.c.l.b16 %v159
    %v658 = vunpack.c.h.b16 %v159
    %v659 = vunpack.c.l.b16 %v160
    %v660 = vunpack.c.h.b16 %v160
    %v661 = vunpack.c.l.b16 %v161
    %v662 = vunpack.c.h.b16 %v161
    %v663 = vunpack.c.l.b16 %v162
    %v664 = vunpack.c.h.b16 %v162
    %v665 = vunpack.c.l.b16 %v163
    %v666 = vunpack.c.h.b16 %v163
    %v667 = vunpack.c.l.b16 %v164
    %v668 = vunpack.c.h.b16 %v164
    %v669 = vunpack.c.l.b16 %v165
    %v670 = vunpack.c.h.b16 %v165
    %v671 = vunpack.c.l.b16 %v166
    %v672 = vunpack.c.h.b16 %v166
    %v673 = vunpack.c.l.b16 %v167
    %v674 = vunpack.c.h.b16 %v167
    %v675 = vunpack.c.l.b16 %v168
    %v676 = vunpack.c.h.b16 %v168
    %v677 = vunpack.c.l.b16 %v169
    %v678 = vunpack.c.h.b16 %v169
    %v679 = vunpack.c.l.b16 %v170
    %v680 = vunpack.c.h.b16 %v170
    %v681 = vunpack.c.l.b16 %v171
    %v682 = vunpack.c.h.b16 %v171
    %v683 = vunpack.c.l.b16 %v172
    %v684 = vunpack.c.h.b16 %v172
    %v685 = vunpack.c.l.b16 %v173
    %v686 = vunpack.c.h.b16 %v173
    %v687 = vunpack.c.l.b16 %v174
    %v688 = vunpack.c.h.b16 %v174
    %v689 = vunpack.c.l.b16 %v175
    %v690 = vunpack.c.h.b16 %v175
    %v691 = vunpack.c.l.b16 %v176
    %v692 = vunpack.c.h.b16 %v176
    %v693 = vunpack.c.l.b16 %v177
    %v694 = vunpack.c.h.b16 %v177
    %v695 = vunpack.c.l.b16 %v178
    %v696 = vunpack.c.h.b16 %v178
    %v697 = vunpack.c.l.b16 %v179
    %v698 = vunpack.c.h.b16 %v179
    %v699 = vunpack.c.l.b16 %v180
    %v700 = vunpack.c.h.b16 %v180
    %v701 = vunpack.c.l.b16 %v181
    %v702 = vunpack.c.h.b16 %v181
    %v703 = vunpack.c.l.b16 %v182
    %v704 = vunpack.c.h.b16 %v182
    %v705 = vunpack.c.l.b16 %v183
    %v706 = vunpack.c.h.b16 %v183
    %v707 = vunpack.c.l.b16 %v184
    %v708 = vunpack.c.h.b16 %v184
    %v709 = vunpack.c.l.b16 %v185
    %v710 = vunpack.c.h.b16 %v185
    %v711 = vunpack.c.l.b16 %v186
    %v712 = vunpack.c.h.b16 %v186
    %v713 = vunpack.c.l.b16 %v187
    %v714 = vunpack.c.h.b16 %v187
    %v715 = vunpack.c.l.b16 %v188
    %v716 = vunpack.c.h.b16 %v188
    %v717 = vunpack.c.l.b16 %v189
    %v718 = vunpack.c.h.b16 %v189
    %v719 = vunpack.c.l.b16 %v190
    %v720 = vunpack.c.h.b16 %v190
    %v721 = vunpack.c.l.b16 %v191
    %v722 = vunpack.c.h.b16 %v191
    %v723 = vunpack.c.l.b16 %v192
    %v724 = vunpack.c.h.b16 %v192
    %v725 = vunpack.c.l.b16 %v193
    %v726 = vunpack.c.h.b16 %v193
    %v727 = vunpack.c.l.b16 %v194
    %v728 = vunpack.c.h.b16 %v194
    %v729 = vunpack.c.l.b16 %v195
    %v730 = vunpack.c.h.b16 %v195
    %v731 = vunpack.c.l.b16 %v196
    %v732 = vunpack.c.h.b16 %v196
    %v733 = vunpack.c.l.b16 %v197
    %v734 = vunpack.c.h.b16 %v197
    %v735 = vunpack.c.l.b16 %v198
    %v736 = vunpack.c.h.b16 %v198
    %v737 = vunpack.c.l.b16 %v199
    %v738 = vunpack.c.h.b16 %v199
    %v739 = vunpack.c.l.b16 %v200
    %v740 = vunpack.c.h.b16 %v200
    %v741 = vunpack.c.l.b16 %v201
    %v742 = vunpack.c.h.b16 %v201
    %v743 = vunpack.c.l.b16 %v202
    %v744 = vunpack.c.h.b16 %v202
    %v745 = vunpack.c.l.b16 %v203
    %v746 = vunpack.c.h.b16 %v203
    %v747 = vunpack.c.l.b16 %v204
    %v748 = vunpack.c.h.b16 %v204
    %v749 = vunpack.c.l.b16 %v205
    %v750 = vunpack.c.h.b16 %v205
    %v751 = vunpack.c.l.b16 %v206
    %v752 = vunpack.c.h.b16 %v206
    %v753 = vunpack.c.l.b16 %v207
    %v754 = vunpack.c.h.b16 %v207
    %v755 = vunpack.c.l.b16 %v208
    %v756 = vunpack.c.h.b16 %v208
    %v757 = vunpack.c.l.b16 %v209
    %v758 = vunpack.c.h.b16 %v209
    %v759 = vunpack.c.l.b16 %v210
    %v760 = vunpack.c.h.b16 %v210
    %v761 = vunpack.c.l.b16 %v211
    %v762 = vunpack.c.h.b16 %v211
    %v763 = vunpack.c.l.b16 %v212
    %v764 = vunpack.c.h.b16 %v212
    %v765 = vunpack.c.l.b16 %v213
    %v766 = vunpack.c.h.b16 %v213
    %v767 = vunpack.c.l.b16 %v214
    %v768 = vunpack.c.h.b16 %v214
    %v769 = vunpack.c.l.b16 %v215
    %v770 = vunpack.c.h.b16 %v215
    %v771 = vunpack.c.l.b16 %v216
    %v772 = vunpack.c.h.b16 %v216
    %v773 = vunpack.c.l.b16 %v217
    %v774 = vunpack.c.h.b16 %v217
    %v775 = vunpack.c.l.b16 %v218
    %v776 = vunpack.c.h.b16 %v218
    %v777 = vunpack.c.l.b16 %v219
    %v778 = vunpack.c.h.b16 %v219
    %v779 = vunpack.c.l.b16 %v220
    %v780 = vunpack.c.h.b16 %v220
    %v781 = vunpack.c.l.b16 %v221
    %v782 = vunpack.c.h.b16 %v221
    %v783 = vunpack.c.l.b16 %v222
    %v784 = vunpack.c.h.b16 %v222
    %v785 = vunpack.c.l.b16 %v223
    %v786 = vunpack.c.h.b16 %v223
    %v787 = vunpack.c.l.b16 %v224
    %v788 = vunpack.c.h.b16 %v224
    %v789 = vunpack.c.l.b16 %v225
    %v790 = vunpack.c.h.b16 %v225
    %v791 = vunpack.c.l.b16 %v226
    %v792 = vunpack.c.h.b16 %v226
    %v793 = vunpack.c.l.b16 %v227
    %v794 = vunpack.c.h.b16 %v227
    %v795 = vunpack.c.l.b16 %v228
    %v796 = vunpack.c.h.b16 %v228
    %v797 = vunpack.c.l.b16 %v229
    %v798 = vunpack.c.h.b16 %v229
    %v799 = vunpack.c.l.b16 %v230
    %v800 = vunpack.c.h.b16 %v230
    %v801 = vunpack.c.l.b16 %v231
    %v802 = vunpack.c.h.b16 %v231
    %v803 = vunpack.c.l.b16 %v232
    %v804 = vunpack.c.h.b16 %v232
    %v805 = vunpack.c.l.b16 %v233
    %v806 = vunpack.c.h.b16 %v233
    %v807 = vunpack.c.l.b16 %v234
    %v808 = vunpack.c.h.b16 %v234
    %v809 = vunpack.c.l.b16 %v235
    %v810 = vunpack.c.h.b16 %v235
    %v811 = vunpack.c.l.b16 %v236
    %v812 = vunpack.c.h.b16 %v236
    %v813 = vunpack.c.l.b16 %v237
    %v814 = vunpack.c.h.b16 %v237
    %v815 = vunpack.c.l.b16 %v238
    %v816 = vunpack.c.h.b16 %v238
    %v817 = vunpack.c.l.b16 %v239
    %v818 = vunpack.c.h.b16 %v239
    %v819 = vunpack.c.l.b16 %v240
    %v820 = vunpack.c.h.b16 %v240
    %v821 = vunpack.c.l.b16 %v241
    %v822 = vunpack.c.h.b16 %v241
    %v823 = vunpack.c.l.b16 %v242
    %v824 = vunpack.c.h.b16 %v242
    %v825 = vunpack.c.l.b16 %v243
    %v826 = vunpack.c.h.b16 %v243
    %v827 = vunpack.c.l.b16 %v244
    %v828 = vunpack.c.h.b16 %v244
    %v829 = vunpack.c.l.b16 %v245
    %v830 = vunpack.c.h.b16 %v245
    %v831 = vunpack.c.l.b16 %v246
    %v832 = vunpack.c.h.b16 %v246
    %v833 = vunpack.c.l.b16 %v247
    %v834 = vunpack.c.h.b16 %v247
    %v835 = vunpack.c.l.b16 %v248
    %v836 = vunpack.c.h.b16 %v248
    %v837 = vunpack.c.l.b16 %v249
    %v838 = vunpack.c.h.b16 %v249
    %v839 = vunpack.c.l.b16 %v250
    %v840 = vunpack.c.h.b16 %v250
    %v841 = vunpack.c.l.b16 %v251
    %v842 = vunpack.c.h.b16 %v251
    %v843 = vunpack.c.l.b16 %v252
    %v844 = vunpack.c.h.b16 %v252
    %v845 = vunpack.c.l.b16 %v253
    %v846 = vunpack.c.h.b16 %v253
    %v847 = vunpack.c.l.b16 %v254
    %v848 = vunpack.c.h.b16 %v254
    %v849 = vunpack.c.l.b16 %v255
    %v850 = vunpack.c.h.b16 %v255
    %v851 = vunpack.c.l.b16 %v256
    %v852 = vunpack.c.h.b16 %v256
    %v853 = vunpack.c.l.b16 %v257
    %v854 = vunpack.c.h.b16 %v257
    %v855 = vunpack.c.l.b16 %v258
    %v856 = vunpack.c.h.b16 %v258
    %v857 = vunpack.c.l.b16 %v259
    %v858 = vunpack.c.h.b16 %v259
    %v859 = vunpack.c.l.b16 %v260
    %v860 = vunpack.c.h.b16 %v260
    %v861 = vunpack.c.l.b16 %v261
    %v862 = vunpack.c.h.b16 %v261
    %v863 = vunpack.c.l.b16 %v262
    %v864 = vunpack.c.h.b16 %v262
    %v865 = vunpack.c.l.b16 %v263
    %v866 = vunpack.c.h.b16 %v263
    %v867 = vunpack.c.l.b16 %v264
    %v868 = vunpack.c.h.b16 %v264
    %v869 = vunpack.c.l.b16 %v265
    %v870 = vunpack.c.h.b16 %v265
    %v871 = vunpack.c.l.b16 %v266
    %v872 = vunpack.c.h.b16 %v266
    %v873 = vunpack.c.l.b16 %v267
    %v874 = vunpack.c.h.b16 %v267
    %v875 = vunpack.c.l.b16 %v268
    %v876 = vunpack.c.h.b16 %v268
    %v877 = vunpack.c.l.b16 %v269
    %v878 = vunpack.c.h.b16 %v269
    %v879 = vunpack.c.l.b16 %v270
    %v880 = vunpack.c.h.b16 %v270
    %v881 = vunpack.c.l.b16 %v271
    %v882 = vunpack.c.h.b16 %v271
    %v883 = vunpack.c.l.b16 %v272
    %v884 = vunpack.c.h.b16 %v272
    %v885 = vunpack.c.l.b16 %v273
    %v886 = vunpack.c.h.b16 %v273
    %v887 = vunpack.c.l.b16 %v274
    %v888 = vunpack.c.h.b16 %v274
    %v889 = vunpack.c.l.b16 %v275
    %v890 = vunpack.c.h.b16 %v275
    %v891 = vunpack.c.l.b16 %v276
    %v892 = vunpack.c.h.b16 %v276
    %v893 = vunpack.c.l.b16 %v277
    %v894 = vunpack.c.h.b16 %v277
    %v895 = vunpack.c.l.b16 %v278
    %v896 = vunpack.c.h.b16 %v278
    %v897 = vunpack.c.l.b16 %v279
    %v898 = vunpack.c.h.b16 %v279
    %v899 = vunpack.c.l.b16 %v280
    %v900 = vunpack.c.h.b16 %v280
    %v901 = vunpack.c.l.b16 %v281
    %v902 = vunpack.c.h.b16 %v281
    %v903 = vunpack.c.l.b16 %v282
    %v904 = vunpack.c.h.b16 %v282
    %v905 = vunpack.c.l.b16 %v283
    %v906 = vunpack.c.h.b16 %v283
    %v907 = vunpack.c.l.b16 %v284
    %v908 = vunpack.c.h.b16 %v284
    %v909 = vunpack.c.l.b16 %v285
    %v910 = vunpack.c.h.b16 %v285
    %v911 = vunpack.c.l.b16 %v286
    %v912 = vunpack.c.h.b16 %v286
    %v913 = vunpack.c.l.b16 %v287
    %v914 = vunpack.c.h.b16 %v287
    %v915 = vunpack.c.l.b16 %v288
    %v916 = vunpack.c.h.b16 %v288
    %v917 = vunpack.c.l.b16 %v289
    %v918 = vunpack.c.h.b16 %v289
    %v919 = vunpack.c.l.b16 %v290
    %v920 = vunpack.c.h.b16 %v290
    %v921 = vunpack.c.l.b16 %v291
    %v922 = vunpack.c.h.b16 %v291
    %v923 = vunpack.c.l.b16 %v292
    %v924 = vunpack.c.h.b16 %v292
    %v925 = vunpack.c.l.b16 %v293
    %v926 = vunpack.c.h.b16 %v293
    %v927 = vunpack.c.l.b16 %v294
    %v928 = vunpack.c.h.b16 %v294
    %v929 = vpack.c.b16 %v541, %v537
    %v930 = vpack.c.b16 %v542, %v538
    %v931 = vpack.c.b16 %v543, %v539
    %v932 = vpack.c.b16 %v544, %v540
    %v933 = vpack.c.b16 %v549, %v545
    %v934 = vpack.c.b16 %v550, %v546
    %v935 = vpack.c.b16 %v551, %v547
    %v936 = vpack.c.b16 %v552, %v548
    %v937 = vpack.c.b16 %v557, %v553
    %v938 = vpack.c.b16 %v558, %v554
    %v939 = vpack.c.b16 %v559, %v555
    %v940 = vpack.c.b16 %v560, %v556
    %v941 = vpack.c.b16 %v565, %v561
    %v942 = vpack.c.b16 %v566, %v562
    %v943 = vpack.c.b16 %v567, %v563
    %v944 = vpack.c.b16 %v568, %v564
    %v945 = vpack.c.b16 %v573, %v569
    %v946 = vpack.c.b16 %v574, %v570
    %v947 = vpack.c.b16 %v575, %v571
    %v948 = vpack.c.b16 %v576, %v572
    %v949 = vpack.c.b16 %v581, %v577
    %v950 = vpack.c.b16 %v582, %v578
    %v951 = vpack.c.b16 %v583, %v579
    %v952 = vpack.c.b16 %v584, %v580
    %v953 = vpack.c.b16 %v589, %v585
    %v954 = vpack.c.b16 %v590, %v586
    %v955 = vpack.c.b16 %v591, %v587
    %v956 = vpack.c.b16 %v592, %v588
    %v957 = vpack.c.b16 %v597, %v593
    %v958 = vpack.c.b16 %v598, %v594
    %v959 = vpack.c.b16 %v599, %v595
    %v960 = vpack.c.b16 %v600, %v596
    %v961 = vpack.c.b16 %v605, %v601
    %v962 = vpack.c.b16 %v606, %v602
    %v963 = vpack.c.b16 %v607, %v603
    %v964 = vpack.c.b16 %v608, %v604
    %v965 = vpack.c.b16 %v613, %v609
    %v966 = vpack.c.b16 %v614, %v610
    %v967 = vpack.c.b16 %v615, %v611
    %v968 = vpack.c.b16 %v616, %v612
    %v969 = vpack.c.b16 %v621, %v617
    %v970 = vpack.c.b16 %v622, %v618
    %v971 = vpack.c.b16 %v623, %v619
    %v972 = vpack.c.b16 %v624, %v620
    %v973 = vpack.c.b16 %v629, %v625
    %v974 = vpack.c.b16 %v630, %v626
    %v975 = vpack.c.b16 %v631, %v627
    %v976 = vpack.c.b16 %v632, %v628
    %v977 = vpack.c.b16 %v637, %v633
    %v978 = vpack.c.b16 %v638, %v634
    %v979 = vpack.c.b16 %v639, %v635
    %v980 = vpack.c.b16 %v640, %v636
    %v981 = vpack.c.b16 %v645, %v641
    %v982 = vpack.c.b16 %v646, %v642
    %v983 = vpack.c.b16 %v647, %v643
    %v984 = vpack.c.b16 %v648, %v644
    %v985 = vpack.c.b16 %v653, %v649
    %v986 = vpack.c.b16 %v654, %v650
    %v987 = vpack.c.b16 %v655, %v651
    %v988 = vpack.c.b16 %v656, %v652
    %v989 = vpack.c.b16 %v661, %v657
    %v990 = vpack.c.b16 %v662, %v658
    %v991 = vpack.c.b16 %v663, %v659
    %v992 = vpack.c.b16 %v664, %v660
    %v993 = vpack.c.b16 %v669, %v665
    %v994 = vpack.c.b16 %v670, %v666
    %v995 = vpack.c.b16 %v671, %v667
    %v996 = vpack.c.b16 %v672, %v668
    %v997 = vpack.c.b16 %v677, %v673
    %v998 = vpack.c.b16 %v678, %v674
    %v999 = vpack.c.b16 %v679, %v675
    %v1000 = vpack.c.b16 %v680, %v676
    %v1001 = vpack.c.b16 %v685, %v681
    %v1002 = vpack.c.b16 %v686, %v682
    %v1003 = vpack.c.b16 %v687, %v683
    %v1004 = vpack.c.b16 %v688, %v684
    %v1005 = vpack.c.b16 %v693, %v689
    %v1006 = vpack.c.b16 %v694, %v690
    %v1007 = vpack.c.b16 %v695, %v691
    %v1008 = vpack.c.b16 %v696, %v692
    %v1009 = vpack.c.b16 %v701, %v697
    %v1010 = vpack.c.b16 %v702, %v698
    %v1011 = vpack.c.b16 %v703, %v699
    %v1012 = vpack.c.b16 %v704, %v700
    %v1013 = vpack.c.b16 %v709, %v705
    %v1014 = vpack.c.b16 %v710, %v706
    %v1015 = vpack.c.b16 %v711, %v707
    %v1016 = vpack.c.b16 %v712, %v708
    %v1017 = vpack.c.b16 %v717, %v713
    %v1018 = vpack.c.b16 %v718, %v714
    %v1019 = vpack.c.b16 %v719, %v715
    %v1020 = vpack.c.b16 %v720, %v716
    %v1021 = vpack.c.b16 %v725, %v721
    %v1022 = vpack.c.b16 %v726, %v722
    %v1023 = vpack.c.b16 %v727, %v723
    %v1024 = vpack.c.b16 %v728, %v724
    %v1025 = vpack.c.b16 %v733, %v729
    %v1026 = vpack.c.b16 %v734, %v730
    %v1027 = vpack.c.b16 %v735, %v731
    %v1028 = vpack.c.b16 %v736, %v732
    %v1029 = vpack.c.b16 %v741, %v737
    %v1030 = vpack.c.b16 %v742, %v738
    %v1031 = vpack.c.b16 %v743, %v739
    %v1032 = vpack.c.b16 %v744, %v740
    %v1033 = vpack.c.b16 %v749, %v745
    %v1034 = vpack.c.b16 %v750, %v746
    %v1035 = vpack.c.b16 %v751, %v747
    %v1036 = vpack.c.b16 %v752, %v748
    %v1037 = vpack.c.b16 %v757, %v753
    %v1038 = vpack.c.b16 %v758, %v754
    %v1039 = vpack.c.b16 %v759, %v755
    %v1040 = vpack.c.b16 %v760, %v756
    %v1041 = vpack.c.b16 %v765, %v761
    %v1042 = vpack.c.b16 %v766, %v762
    %v1043 = vpack.c.b16 %v767, %v763
    %v1044 = vpack.c.b16 %v768, %v764
    %v1045 = vpack.c.b16 %v773, %v769
    %v1046 = vpack.c.b16 %v774, %v770
    %v1047 = vpack.c.b16 %v775, %v771
    %v1048 = vpack.c.b16 %v776, %v772
    %v1049 = vpack.c.b16 %v781, %v777
    %v1050 = vpack.c.b16 %v782, %v778
    %v1051 = vpack.c.b16 %v783, %v779
    %v1052 = vpack.c.b16 %v784, %v780
    %v1053 = vpack.c.b16 %v789, %v785
    %v1054 = vpack.c.b16 %v790, %v786
    %v1055 = vpack.c.b16 %v791, %v787
    %v1056 = vpack.c.b16 %v792, %v788
    %v1057 = vpack.c.b16 %v797, %v793
    %v1058 = vpack.c.b16 %v798, %v794
    %v1059 = vpack.c.b16 %v799, %v795
    %v1060 = vpack.c.b16 %v800, %v796
    %v1061 = vpack.c.b16 %v805, %v801
    %v1062 = vpack.c.b16 %v806, %v802
    %v1063 = vpack.c.b16 %v807, %v803
    %v1064 = vpack.c.b16 %v808, %v804
    %v1065 = vpack.c.b16 %v813, %v809
    %v1066 = vpack.c.b16 %v814, %v810
    %v1067 = vpack.c.b16 %v815, %v811
    %v1068 = vpack.c.b16 %v816, %v812
    %v1069 = vpack.c.b16 %v821, %v817
    %v1070 = vpack.c.b16 %v822, %v818
    %v1071 = vpack.c.b16 %v823, %v819
    %v1072 = vpack.c.b16 %v824, %v820
    %v1073 = vpack.c.b16 %v829, %v825
    %v1074 = vpack.c.b16 %v830, %v826
    %v1075 = vpack.c.b16 %v831, %v827
    %v1076 = vpack.c.b16 %v832, %v828
    %v1077 = vpack.c.b16 %v837, %v833
    %v1078 = vpack.c.b16 %v838, %v834
    %v1079 = vpack.c.b16 %v839, %v835
    %v1080 = vpack.c.b16 %v840, %v836
    %v1081 = vpack.c.b16 %v845, %v841
    %v1082 = vpack.c.b16 %v846, %v842
    %v1083 = vpack.c.b16 %v847, %v843
    %v1084 = vpack.c.b16 %v848, %v844
    %v1085 = vpack.c.b16 %v853, %v849
    %v1086 = vpack.c.b16 %v854, %v850
    %v1087 = vpack.c.b16 %v855, %v851
    %v1088 = vpack.c.b16 %v856, %v852
    %v1089 = vpack.c.b16 %v861, %v857
    %v1090 = vpack.c.b16 %v862, %v858
    %v1091 = vpack.c.b16 %v863, %v859
    %v1092 = vpack.c.b16 %v864, %v860
    %v1093 = vpack.c.b16 %v869, %v865
    %v1094 = vpack.c.b16 %v870, %v866
    %v1095 = vpack.c.b16 %v871, %v867
    %v1096 = vpack.c.b16 %v872, %v868
    %v1097 = vpack.c.b16 %v877, %v873
    %v1098 = vpack.c.b16 %v878, %v874
    %v1099 = vpack.c.b16 %v879, %v875
    %v1100 = vpack.c.b16 %v880, %v876
    %v1101 = vpack.c.b16 %v885, %v881
    %v1102 = vpack.c.b16 %v886, %v882
    %v1103 = vpack.c.b16 %v887, %v883
    %v1104 = vpack.c.b16 %v888, %v884
    %v1105 = vpack.c.b16 %v893, %v889
    %v1106 = vpack.c.b16 %v894, %v890
    %v1107 = vpack.c.b16 %v895, %v891
    %v1108 = vpack.c.b16 %v896, %v892
    %v1109 = vpack.c.b16 %v901, %v897
    %v1110 = vpack.c.b16 %v902, %v898
    %v1111 = vpack.c.b16 %v903, %v899
    %v1112 = vpack.c.b16 %v904, %v900
    %v1113 = vpack.c.b16 %v909, %v905
    %v1114 = vpack.c.b16 %v910, %v906
    %v1115 = vpack.c.b16 %v911, %v907
    %v1116 = vpack.c.b16 %v912, %v908
    %v1117 = vpack.c.b16 %v917, %v913
    %v1118 = vpack.c.b16 %v918, %v914
    %v1119 = vpack.c.b16 %v919, %v915
    %v1120 = vpack.c.b16 %v920, %v916
    %v1121 = vpack.c.b16 %v925, %v921
    %v1122 = vpack.c.b16 %v926, %v922
    %v1123 = vpack.c.b16 %v927, %v923
    %v1124 = vpack.c.b16 %v928, %v924
    %vm1321 = vcmask 130048
    %v1323 = vsel %vm1321, %v334, 0
    %1325 = vmatprep.subr.bf16.mxu0 %v930
    %1326 = vmatpush1.bf16.msra.mxu0 %v929
    %1327 = vmatprep.subr.bf16.mxu0 %v934
    %1328 = vmatpush1.bf16.msra.mxu0 %v933
    %1329 = vmatprep.subr.bf16.mxu0 %v938
    %1330 = vmatpush1.bf16.msra.mxu0 %v937
    %1331 = vmatprep.subr.bf16.mxu0 %v942
    %1332 = vmatpush1.bf16.msra.mxu0 %v941
    %1333 = vmatprep.subr.bf16.mxu0 %v946
    %1334 = vmatpush1.bf16.msra.mxu0 %v945
    %1335 = vmatprep.subr.bf16.mxu0 %v950
    %1336 = vmatpush1.bf16.msra.mxu0 %v949
    %1337 = vmatprep.subr.bf16.mxu0 %v954
    %1338 = vmatpush1.bf16.msra.mxu0 %v953
    %1339 = vmatprep.subr.bf16.mxu0 %v958
    %1340 = vmatpush1.bf16.msra.mxu0 %v957
    %1341 = vmatprep.subr.bf16.mxu0 %v962
    %1342 = vmatpush1.bf16.msra.mxu0 %v961
    %1343 = vmatprep.subr.bf16.mxu0 %v966
    %1344 = vmatpush1.bf16.msra.mxu0 %v965
    %1345 = vmatprep.subr.bf16.mxu0 %v970
    %1346 = vmatpush1.bf16.msra.mxu0 %v969
    %1347 = vmatprep.subr.bf16.mxu0 %v974
    %1348 = vmatpush1.bf16.msra.mxu0 %v973
    %1349 = vmatprep.subr.bf16.mxu0 %v978
    %1350 = vmatpush1.bf16.msra.mxu0 %v977
    %1351 = vmatprep.subr.bf16.mxu0 %v982
    %1352 = vmatpush1.bf16.msra.mxu0 %v981
    %1353 = vmatprep.subr.bf16.mxu0 %v986
    %1354 = vmatpush1.bf16.msra.mxu0 %v985
    %1355 = vmatprep.subr.bf16.mxu0 %v990
    %1356 = vmatpush1.bf16.msra.mxu0 %v989
    %1357 = vmatprep.mubr.bf16.mxu0 %v329
    %1358 = vmatmul.mubr.bf16.gmra.mrb[0].mxu0 %v328
    %v1359 = vpop.f32.mrb[0].mxu0
    %v1360 = vadd.f32 %v300, %v1359
    %v1361 = vpop.f32.mrb[0].mxu0
    %v1362 = vadd.f32 %v304, %v1361
    %v1363 = vpop.f32.mrb[0].mxu0
    %v1364 = vpop.f32.mrb[0].mxu0
    %1365 = vdwg.mxu0
    %1366 = vmatprep.subr.bf16.mxu0 %v994
    %1367 = vmatpush1.bf16.msra.mxu0 %v993
    %1368 = vmatprep.subr.bf16.mxu0 %v998
    %1369 = vmatpush1.bf16.msra.mxu0 %v997
    %1370 = vmatprep.subr.bf16.mxu0 %v1002
    %1371 = vmatpush1.bf16.msra.mxu0 %v1001
    %1372 = vmatprep.subr.bf16.mxu0 %v1006
    %1373 = vmatpush1.bf16.msra.mxu0 %v1005
    %1374 = vmatprep.subr.bf16.mxu0 %v1010
    %1375 = vmatpush1.bf16.msra.mxu0 %v1009
    %1376 = vmatprep.subr.bf16.mxu0 %v1014
    %1377 = vmatpush1.bf16.msra.mxu0 %v1013
    %1378 = vmatprep.subr.bf16.mxu0 %v1018
    %1379 = vmatpush1.bf16.msra.mxu0 %v1017
    %1380 = vmatprep.subr.bf16.mxu0 %v1022
    %1381 = vmatpush1.bf16.msra.mxu0 %v1021
    %1382 = vmatprep.subr.bf16.mxu0 %v1026
    %1383 = vmatpush1.bf16.msra.mxu0 %v1025
    %1384 = vmatprep.subr.bf16.mxu0 %v1030
    %1385 = vmatpush1.bf16.msra.mxu0 %v1029
    %1386 = vmatprep.subr.bf16.mxu0 %v1034
    %1387 = vmatpush1.bf16.msra.mxu0 %v1033
    %1388 = vmatprep.subr.bf16.mxu0 %v1038
    %1389 = vmatpush1.bf16.msra.mxu0 %v1037
    %1390 = vmatprep.subr.bf16.mxu0 %v1042
    %1391 = vmatpush1.bf16.msra.mxu0 %v1041
    %1392 = vmatprep.subr.bf16.mxu0 %v1046
    %1393 = vmatpush1.bf16.msra.mxu0 %v1045
    %1394 = vmatprep.subr.bf16.mxu0 %v1050
    %1395 = vmatpush1.bf16.msra.mxu0 %v1049
    %1396 = vmatprep.subr.bf16.mxu0 %v1054
    %1397 = vmatpush1.bf16.msra.mxu0 %v1053
    %1398 = vmatprep.mubr.bf16.mxu0 %v331
    %1399 = vmatmul.mubr.bf16.gmra.mrb[0].mxu0 %v330
    %v1400 = vpop.f32.mrb[0].mxu0
    %v1401 = vadd.f32 %v1360, %v1400
    %v1402 = vpop.f32.mrb[0].mxu0
    %v1403 = vadd.f32 %v1362, %v1402
    %v1404 = vpop.f32.mrb[0].mxu0
    %v1405 = vpop.f32.mrb[0].mxu0
    %1406 = vdwg.mxu0
    %1407 = vmatprep.subr.bf16.mxu0 %v1058
    %1408 = vmatpush1.bf16.msra.mxu0 %v1057
    %1409 = vmatprep.subr.bf16.mxu0 %v1062
    %1410 = vmatpush1.bf16.msra.mxu0 %v1061
    %1411 = vmatprep.subr.bf16.mxu0 %v1066
    %1412 = vmatpush1.bf16.msra.mxu0 %v1065
    %1413 = vmatprep.subr.bf16.mxu0 %v1070
    %1414 = vmatpush1.bf16.msra.mxu0 %v1069
    %1415 = vmatprep.subr.bf16.mxu0 %v1074
    %1416 = vmatpush1.bf16.msra.mxu0 %v1073
    %1417 = vmatprep.subr.bf16.mxu0 %v1078
    %1418 = vmatpush1.bf16.msra.mxu0 %v1077
    %1419 = vmatprep.subr.bf16.mxu0 %v1082
    %1420 = vmatpush1.bf16.msra.mxu0 %v1081
    %1421 = vmatprep.subr.bf16.mxu0 %v1086
    %1422 = vmatpush1.bf16.msra.mxu0 %v1085
    %1423 = vmatprep.subr.bf16.mxu0 %v1090
    %1424 = vmatpush1.bf16.msra.mxu0 %v1089
    %1425 = vmatprep.subr.bf16.mxu0 %v1094
    %1426 = vmatpush1.bf16.msra.mxu0 %v1093
    %1427 = vmatprep.subr.bf16.mxu0 %v1098
    %1428 = vmatpush1.bf16.msra.mxu0 %v1097
    %1429 = vmatprep.subr.bf16.mxu0 %v1102
    %1430 = vmatpush1.bf16.msra.mxu0 %v1101
    %1431 = vmatprep.subr.bf16.mxu0 %v1106
    %1432 = vmatpush1.bf16.msra.mxu0 %v1105
    %1433 = vmatprep.subr.bf16.mxu0 %v1110
    %1434 = vmatpush1.bf16.msra.mxu0 %v1109
    %1435 = vmatprep.subr.bf16.mxu0 %v1114
    %1436 = vmatpush1.bf16.msra.mxu0 %v1113
    %1437 = vmatprep.subr.bf16.mxu0 %v1118
    %1438 = vmatpush1.bf16.msra.mxu0 %v1117
    %1439 = vmatprep.mubr.bf16.mxu0 %v333
    %1440 = vmatmul.mubr.bf16.gmra.mrb[0].mxu0 %v332
    %v1441 = vpop.f32.mrb[0].mxu0
    %v1442 = vadd.f32 %v1401, %v1441
    %v1443 = vpop.f32.mrb[0].mxu0
    %v1444 = vadd.f32 %v1403, %v1443
    %v1445 = vpop.f32.mrb[0].mxu0
    %v1446 = vpop.f32.mrb[0].mxu0
    %1447 = vdwg.mxu0
    %1448 = vmatprep.subr.bf16.mxu0 %v1122
    %1449 = vmatpush1.bf16.msra.mxu0 %v1121
    %1450 = vmatprep.subr.bf16.mxu0 0
    %1451 = vmatpush1.bf16.msra.mxu0 0
    %1452 = vmatprep.subr.bf16.mxu0 0
    %1453 = vmatpush1.bf16.msra.mxu0 0
    %1454 = vmatprep.subr.bf16.mxu0 0
    %1455 = vmatpush1.bf16.msra.mxu0 0
    %1456 = vmatprep.subr.bf16.mxu0 0
    %1457 = vmatpush1.bf16.msra.mxu0 0
    %1458 = vmatprep.subr.bf16.mxu0 0
    %1459 = vmatpush1.bf16.msra.mxu0 0
    %1460 = vmatprep.subr.bf16.mxu0 0
    %1461 = vmatpush1.bf16.msra.mxu0 0
    %1462 = vmatprep.subr.bf16.mxu0 0
    %1463 = vmatpush1.bf16.msra.mxu0 0
    %1464 = vmatprep.subr.bf16.mxu0 0
    %1465 = vmatpush1.bf16.msra.mxu0 0
    %1466 = vmatprep.subr.bf16.mxu0 0
    %1467 = vmatpush1.bf16.msra.mxu0 0
    %1468 = vmatprep.subr.bf16.mxu0 0
    %1469 = vmatpush1.bf16.msra.mxu0 0
    %1470 = vmatprep.subr.bf16.mxu0 0
    %1471 = vmatpush1.bf16.msra.mxu0 0
    %1472 = vmatprep.subr.bf16.mxu0 0
    %1473 = vmatpush1.bf16.msra.mxu0 0
    %1474 = vmatprep.subr.bf16.mxu0 0
    %1475 = vmatpush1.bf16.msra.mxu0 0
    %1476 = vmatprep.subr.bf16.mxu0 0
    %1477 = vmatpush1.bf16.msra.mxu0 0
    %1478 = vmatprep.subr.bf16.mxu0 0
    %1479 = vmatpush1.bf16.msra.mxu0 0
    %1480 = vmatprep.mubr.bf16.mxu0 0
    %1481 = vmatmul.mubr.bf16.gmra.mrb[0].mxu0 %v1323
    %v1482 = vpop.f32.mrb[0].mxu0
    %v1483 = vadd.f32 %v1442, %v1482
    %v1484 = vpop.f32.mrb[0].mxu0
    %v1485 = vadd.f32 %v1444, %v1484
    %v1486 = vpop.f32.mrb[0].mxu0
    %v1487 = vpop.f32.mrb[0].mxu0
    %1488 = vdwg.mxu0
    %1489 = vmatprep.subr.bf16.mxu0 %v932
    %1490 = vmatpush1.bf16.msra.mxu0 %v931
    %1491 = vmatprep.subr.bf16.mxu0 %v936
    %1492 = vmatpush1.bf16.msra.mxu0 %v935
    %1493 = vmatprep.subr.bf16.mxu0 %v940
    %1494 = vmatpush1.bf16.msra.mxu0 %v939
    %1495 = vmatprep.subr.bf16.mxu0 %v944
    %1496 = vmatpush1.bf16.msra.mxu0 %v943
    %1497 = vmatprep.subr.bf16.mxu0 %v948
    %1498 = vmatpush1.bf16.msra.mxu0 %v947
    %1499 = vmatprep.subr.bf16.mxu0 %v952
    %1500 = vmatpush1.bf16.msra.mxu0 %v951
    %1501 = vmatprep.subr.bf16.mxu0 %v956
    %1502 = vmatpush1.bf16.msra.mxu0 %v955
    %1503 = vmatprep.subr.bf16.mxu0 %v960
    %1504 = vmatpush1.bf16.msra.mxu0 %v959
    %1505 = vmatprep.subr.bf16.mxu0 %v964
    %1506 = vmatpush1.bf16.msra.mxu0 %v963
    %1507 = vmatprep.subr.bf16.mxu0 %v968
    %1508 = vmatpush1.bf16.msra.mxu0 %v967
    %1509 = vmatprep.subr.bf16.mxu0 %v972
    %1510 = vmatpush1.bf16.msra.mxu0 %v971
    %1511 = vmatprep.subr.bf16.mxu0 %v976
    %1512 = vmatpush1.bf16.msra.mxu0 %v975
    %1513 = vmatprep.subr.bf16.mxu0 %v980
    %1514 = vmatpush1.bf16.msra.mxu0 %v979
    %1515 = vmatprep.subr.bf16.mxu0 %v984
    %1516 = vmatpush1.bf16.msra.mxu0 %v983
    %1517 = vmatprep.subr.bf16.mxu0 %v988
    %1518 = vmatpush1.bf16.msra.mxu0 %v987
    %1519 = vmatprep.subr.bf16.mxu0 %v992
    %1520 = vmatpush1.bf16.msra.mxu0 %v991
    %1521 = vmatprep.mubr.bf16.mxu0 %v329
    %1522 = vmatmul.mubr.bf16.gmra.mrb[0].mxu0 %v328
    %v1523 = vpop.f32.mrb[0].mxu0
    %v1524 = vadd.f32 %v308, %v1523
    %v1525 = vpop.f32.mrb[0].mxu0
    %v1526 = vadd.f32 %v312, %v1525
    %v1527 = vpop.f32.mrb[0].mxu0
    %v1528 = vpop.f32.mrb[0].mxu0
    %1529 = vdwg.mxu0
    %1530 = vmatprep.subr.bf16.mxu0 %v996
    %1531 = vmatpush1.bf16.msra.mxu0 %v995
    %1532 = vmatprep.subr.bf16.mxu0 %v1000
    %1533 = vmatpush1.bf16.msra.mxu0 %v999
    %1534 = vmatprep.subr.bf16.mxu0 %v1004
    %1535 = vmatpush1.bf16.msra.mxu0 %v1003
    %1536 = vmatprep.subr.bf16.mxu0 %v1008
    %1537 = vmatpush1.bf16.msra.mxu0 %v1007
    %1538 = vmatprep.subr.bf16.mxu0 %v1012
    %1539 = vmatpush1.bf16.msra.mxu0 %v1011
    %1540 = vmatprep.subr.bf16.mxu0 %v1016
    %1541 = vmatpush1.bf16.msra.mxu0 %v1015
    %1542 = vmatprep.subr.bf16.mxu0 %v1020
    %1543 = vmatpush1.bf16.msra.mxu0 %v1019
    %1544 = vmatprep.subr.bf16.mxu0 %v1024
    %1545 = vmatpush1.bf16.msra.mxu0 %v1023
    %1546 = vmatprep.subr.bf16.mxu0 %v1028
    %1547 = vmatpush1.bf16.msra.mxu0 %v1027
    %1548 = vmatprep.subr.bf16.mxu0 %v1032
    %1549 = vmatpush1.bf16.msra.mxu0 %v1031
    %1550 = vmatprep.subr.bf16.mxu0 %v1036
    %1551 = vmatpush1.bf16.msra.mxu0 %v1035
    %1552 = vmatprep.subr.bf16.mxu0 %v1040
    %1553 = vmatpush1.bf16.msra.mxu0 %v1039
    %1554 = vmatprep.subr.bf16.mxu0 %v1044
    %1555 = vmatpush1.bf16.msra.mxu0 %v1043
    %1556 = vmatprep.subr.bf16.mxu0 %v1048
    %1557 = vmatpush1.bf16.msra.mxu0 %v1047
    %1558 = vmatprep.subr.bf16.mxu0 %v1052
    %1559 = vmatpush1.bf16.msra.mxu0 %v1051
    %1560 = vmatprep.subr.bf16.mxu0 %v1056
    %1561 = vmatpush1.bf16.msra.mxu0 %v1055
    %1562 = vmatprep.mubr.bf16.mxu0 %v331
    %1563 = vmatmul.mubr.bf16.gmra.mrb[0].mxu0 %v330
    %v1564 = vpop.f32.mrb[0].mxu0
    %v1565 = vadd.f32 %v1524, %v1564
    %v1566 = vpop.f32.mrb[0].mxu0
    %v1567 = vadd.f32 %v1526, %v1566
    %v1568 = vpop.f32.mrb[0].mxu0
    %v1569 = vpop.f32.mrb[0].mxu0
    %1570 = vdwg.mxu0
    %1571 = vmatprep.subr.bf16.mxu0 %v1060
    %1572 = vmatpush1.bf16.msra.mxu0 %v1059
    %1573 = vmatprep.subr.bf16.mxu0 %v1064
    %1574 = vmatpush1.bf16.msra.mxu0 %v1063
    %1575 = vmatprep.subr.bf16.mxu0 %v1068
    %1576 = vmatpush1.bf16.msra.mxu0 %v1067
    %1577 = vmatprep.subr.bf16.mxu0 %v1072
    %1578 = vmatpush1.bf16.msra.mxu0 %v1071
    %1579 = vmatprep.subr.bf16.mxu0 %v1076
    %1580 = vmatpush1.bf16.msra.mxu0 %v1075
    %1581 = vmatprep.subr.bf16.mxu0 %v1080
    %1582 = vmatpush1.bf16.msra.mxu0 %v1079
    %1583 = vmatprep.subr.bf16.mxu0 %v1084
    %1584 = vmatpush1.bf16.msra.mxu0 %v1083
    %1585 = vmatprep.subr.bf16.mxu0 %v1088
    %1586 = vmatpush1.bf16.msra.mxu0 %v1087
    %1587 = vmatprep.subr.bf16.mxu0 %v1092
    %1588 = vmatpush1.bf16.msra.mxu0 %v1091
    %1589 = vmatprep.subr.bf16.mxu0 %v1096
    %1590 = vmatpush1.bf16.msra.mxu0 %v1095
    %1591 = vmatprep.subr.bf16.mxu0 %v1100
    %1592 = vmatpush1.bf16.msra.mxu0 %v1099
    %1593 = vmatprep.subr.bf16.mxu0 %v1104
    %1594 = vmatpush1.bf16.msra.mxu0 %v1103
    %1595 = vmatprep.subr.bf16.mxu0 %v1108
    %1596 = vmatpush1.bf16.msra.mxu0 %v1107
    %1597 = vmatprep.subr.bf16.mxu0 %v1112
    %1598 = vmatpush1.bf16.msra.mxu0 %v1111
    %1599 = vmatprep.subr.bf16.mxu0 %v1116
    %1600 = vmatpush1.bf16.msra.mxu0 %v1115
    %1601 = vmatprep.subr.bf16.mxu0 %v1120
    %1602 = vmatpush1.bf16.msra.mxu0 %v1119
    %1603 = vmatprep.mubr.bf16.mxu0 %v333
    %1604 = vmatmul.mubr.bf16.gmra.mrb[0].mxu0 %v332
    %v1605 = vpop.f32.mrb[0].mxu0
    %v1606 = vadd.f32 %v1565, %v1605
    %v1607 = vpop.f32.mrb[0].mxu0
    %v1608 = vadd.f32 %v1567, %v1607
    %v1609 = vpop.f32.mrb[0].mxu0
    %v1610 = vpop.f32.mrb[0].mxu0
    %1611 = vdwg.mxu0
    %1612 = vmatprep.subr.bf16.mxu0 %v1124
    %1613 = vmatpush1.bf16.msra.mxu0 %v1123
    %1614 = vmatprep.subr.bf16.mxu0 0
    %1615 = vmatpush1.bf16.msra.mxu0 0
    %1616 = vmatprep.subr.bf16.mxu0 0
    %1617 = vmatpush1.bf16.msra.mxu0 0
    %1618 = vmatprep.subr.bf16.mxu0 0
    %1619 = vmatpush1.bf16.msra.mxu0 0
    %1620 = vmatprep.subr.bf16.mxu0 0
    %1621 = vmatpush1.bf16.msra.mxu0 0
    %1622 = vmatprep.subr.bf16.mxu0 0
    %1623 = vmatpush1.bf16.msra.mxu0 0
    %1624 = vmatprep.subr.bf16.mxu0 0
    %1625 = vmatpush1.bf16.msra.mxu0 0
    %1626 = vmatprep.subr.bf16.mxu0 0
    %1627 = vmatpush1.bf16.msra.mxu0 0
    %1628 = vmatprep.subr.bf16.mxu0 0
    %1629 = vmatpush1.bf16.msra.mxu0 0
    %1630 = vmatprep.subr.bf16.mxu0 0
    %1631 = vmatpush1.bf16.msra.mxu0 0
    %1632 = vmatprep.subr.bf16.mxu0 0
    %1633 = vmatpush1.bf16.msra.mxu0 0
    %1634 = vmatprep.subr.bf16.mxu0 0
    %1635 = vmatpush1.bf16.msra.mxu0 0
    %1636 = vmatprep.subr.bf16.mxu0 0
    %1637 = vmatpush1.bf16.msra.mxu0 0
    %1638 = vmatprep.subr.bf16.mxu0 0
    %1639 = vmatpush1.bf16.msra.mxu0 0
    %1640 = vmatprep.subr.bf16.mxu0 0
    %1641 = vmatpush1.bf16.msra.mxu0 0
    %1642 = vmatprep.subr.bf16.mxu0 0
    %1643 = vmatpush1.bf16.msra.mxu0 0
    %1644 = vmatprep.mubr.bf16.mxu0 0
    %1645 = vmatmul.mubr.bf16.gmra.mrb[0].mxu0 %v1323
    %v1646 = vpop.f32.mrb[0].mxu0
    %v1647 = vadd.f32 %v1606, %v1646
    %v1648 = vpop.f32.mrb[0].mxu0
    %v1649 = vadd.f32 %v1608, %v1648
    %v1650 = vpop.f32.mrb[0].mxu0
    %v1651 = vpop.f32.mrb[0].mxu0
    %1652 = vdwg.mxu0
    %v1653 = vmax.f32 %v1483, 0.0
    %v1654 = vmax.f32 %v1485, 0.0
    %v1655 = vmax.f32 %v1647, 0.0
    %v1656 = vmax.f32 %v1649, 0.0
    %v1657 = vpack.c.bf16 %v1653, %v1653
    %v1658 = vpack.c.bf16 %v1654, %v1654
    %v1659 = vpack.c.bf16 %v1655, %v1655
    %v1660 = vpack.c.bf16 %v1656, %v1656
    %v1661 = vld [vmem:[%s3] sm:$0xff]
    %v1662 = vld [vmem:[%s3 + $0x8] sm:$0xff]
    %v1663 = vld [vmem:[%s3 + $0x10] sm:$0xff]
    %v1664 = vld [vmem:[%s3 + $0x18] sm:$0xff]
    %v1665 = vld [vmem:[%s3 + $0x20] sm:$0xff]
    %v1666 = vld [vmem:[%s3 + $0x28] sm:$0xff]
    %v1667 = vld [vmem:[%s3 + $0x30] sm:$0xff]
    %v1668 = vld [vmem:[%s3 + $0x38] sm:$0xff]
    %v1669 = vld [vmem:[%s3 + $0x40] sm:$0xff]
    %v1670 = vld [vmem:[%s3 + $0x48] sm:$0xff]
    %v1671 = vld [vmem:[%s3 + $0x50] sm:$0xff]
    %v1672 = vld [vmem:[%s3 + $0x58] sm:$0xff]
    %v1673 = vld [vmem:[%s3 + $0x60] sm:$0xff]
    %v1674 = vld [vmem:[%s3 + $0x68] sm:$0xff]
    %v1675 = vld [vmem:[%s3 + $0x70] sm:$0xff]
    %v1676 = vld [vmem:[%s3 + $0x78] sm:$0xff]
    %v1677 = vld [vmem:[%s3 + $0x80] sm:$0xff]
    %v1678 = vld [vmem:[%s3 + $0x88] sm:$0xff]
    %v1679 = vld [vmem:[%s3 + $0x90] sm:$0xff]
    %v1680 = vld [vmem:[%s3 + $0x98] sm:$0xff]
    %v1681 = vld [vmem:[%s3 + $0xa0] sm:$0xff]
    %v1682 = vld [vmem:[%s3 + $0xa8] sm:$0xff]
    %v1683 = vld [vmem:[%s3 + $0xb0] sm:$0xff]
    %v1684 = vld [vmem:[%s3 + $0xb8] sm:$0xff]
    %v1685 = vld [vmem:[%s3 + $0xc0] sm:$0xff]
    %v1686 = vld [vmem:[%s3 + $0xc8] sm:$0xff]
    %v1687 = vld [vmem:[%s3 + $0xd0] sm:$0xff]
    %v1688 = vld [vmem:[%s3 + $0xd8] sm:$0xff]
    %v1689 = vld [vmem:[%s3 + $0xe0] sm:$0xff]
    %v1690 = vld [vmem:[%s3 + $0xe8] sm:$0xff]
    %v1691 = vld [vmem:[%s3 + $0xf0] sm:$0xff]
    %v1692 = vld [vmem:[%s3 + $0xf8] sm:$0xff]
    %v1693 = vld [vmem:[%s3 + $0x100] sm:$0xff]
    %v1694 = vld [vmem:[%s3 + $0x108] sm:$0xff]
    %v1695 = vld [vmem:[%s3 + $0x110] sm:$0xff]
    %v1696 = vld [vmem:[%s3 + $0x118] sm:$0xff]
    %v1697 = vld [vmem:[%s3 + $0x120] sm:$0xff]
    %v1698 = vld [vmem:[%s3 + $0x128] sm:$0xff]
    %v1699 = vld [vmem:[%s3 + $0x130] sm:$0xff]
    %v1700 = vld [vmem:[%s3 + $0x138] sm:$0xff]
    %v1701 = vld [vmem:[%s3 + $0x140] sm:$0xff]
    %v1702 = vld [vmem:[%s3 + $0x148] sm:$0xff]
    %v1703 = vld [vmem:[%s3 + $0x150] sm:$0xff]
    %v1704 = vld [vmem:[%s3 + $0x158] sm:$0xff]
    %v1705 = vld [vmem:[%s3 + $0x160] sm:$0xff]
    %v1706 = vld [vmem:[%s3 + $0x168] sm:$0xff]
    %v1707 = vld [vmem:[%s3 + $0x170] sm:$0xff]
    %v1708 = vld [vmem:[%s3 + $0x178] sm:$0xff]
    %v1709 = vld [vmem:[%s3 + $0x180] sm:$0xff]
    %v1710 = vld [vmem:[%s3 + $0x188] sm:$0xff]
    %v1711 = vld [vmem:[%s3 + $0x190] sm:$0xff]
    %v1712 = vld [vmem:[%s3 + $0x198] sm:$0xff]
    %v1713 = vld [vmem:[%s3 + $0x1a0] sm:$0xff]
    %v1714 = vld [vmem:[%s3 + $0x1a8] sm:$0xff]
    %v1715 = vld [vmem:[%s3 + $0x1b0] sm:$0xff]
    %v1716 = vld [vmem:[%s3 + $0x1b8] sm:$0xff]
    %v1717 = vld [vmem:[%s3 + $0x1c0] sm:$0xff]
    %v1718 = vld [vmem:[%s3 + $0x1c8] sm:$0xff]
    %v1719 = vld [vmem:[%s3 + $0x1d0] sm:$0xff]
    %v1720 = vld [vmem:[%s3 + $0x1d8] sm:$0xff]
    %v1721 = vld [vmem:[%s3 + $0x1e0] sm:$0xff]
    %v1722 = vld [vmem:[%s3 + $0x1e8] sm:$0xff]
    %v1723 = vld [vmem:[%s3 + $0x1f0] sm:$0xff]
    %v1724 = vld [vmem:[%s3 + $0x1f8] sm:$0xff]
    %v1725 = vld [vmem:[%s4] sm:$0x3]
    %v1727 = vlaneseq
    %v1728 = vshrl.u32 %v1727, 7
    %v1729 = vsub.s32 0, %v1728
    %v1730 = vrot.slane %v1725, %v1729
    %v1731 = vlaneseq
    %v1732 = vshrl.u32 %v1731, 7
    %v1733 = vsub.s32 1, %v1732
    %v1734 = vrot.slane %v1725, %v1733
    %v1801 = vunpack.c.l.b16 %v1661
    %v1802 = vunpack.c.h.b16 %v1661
    %v1803 = vunpack.c.l.b16 %v1662
    %v1804 = vunpack.c.h.b16 %v1662
    %v1805 = vunpack.c.l.b16 %v1663
    %v1806 = vunpack.c.h.b16 %v1663
    %v1807 = vunpack.c.l.b16 %v1664
    %v1808 = vunpack.c.h.b16 %v1664
    %v1809 = vunpack.c.l.b16 %v1665
    %v1810 = vunpack.c.h.b16 %v1665
    %v1811 = vunpack.c.l.b16 %v1666
    %v1812 = vunpack.c.h.b16 %v1666
    %v1813 = vunpack.c.l.b16 %v1667
    %v1814 = vunpack.c.h.b16 %v1667
    %v1815 = vunpack.c.l.b16 %v1668
    %v1816 = vunpack.c.h.b16 %v1668
    %v1817 = vunpack.c.l.b16 %v1669
    %v1818 = vunpack.c.h.b16 %v1669
    %v1819 = vunpack.c.l.b16 %v1670
    %v1820 = vunpack.c.h.b16 %v1670
    %v1821 = vunpack.c.l.b16 %v1671
    %v1822 = vunpack.c.h.b16 %v1671
    %v1823 = vunpack.c.l.b16 %v1672
    %v1824 = vunpack.c.h.b16 %v1672
    %v1825 = vunpack.c.l.b16 %v1673
    %v1826 = vunpack.c.h.b16 %v1673
    %v1827 = vunpack.c.l.b16 %v1674
    %v1828 = vunpack.c.h.b16 %v1674
    %v1829 = vunpack.c.l.b16 %v1675
    %v1830 = vunpack.c.h.b16 %v1675
    %v1831 = vunpack.c.l.b16 %v1676
    %v1832 = vunpack.c.h.b16 %v1676
    %v1833 = vunpack.c.l.b16 %v1677
    %v1834 = vunpack.c.h.b16 %v1677
    %v1835 = vunpack.c.l.b16 %v1678
    %v1836 = vunpack.c.h.b16 %v1678
    %v1837 = vunpack.c.l.b16 %v1679
    %v1838 = vunpack.c.h.b16 %v1679
    %v1839 = vunpack.c.l.b16 %v1680
    %v1840 = vunpack.c.h.b16 %v1680
    %v1841 = vunpack.c.l.b16 %v1681
    %v1842 = vunpack.c.h.b16 %v1681
    %v1843 = vunpack.c.l.b16 %v1682
    %v1844 = vunpack.c.h.b16 %v1682
    %v1845 = vunpack.c.l.b16 %v1683
    %v1846 = vunpack.c.h.b16 %v1683
    %v1847 = vunpack.c.l.b16 %v1684
    %v1848 = vunpack.c.h.b16 %v1684
    %v1849 = vunpack.c.l.b16 %v1685
    %v1850 = vunpack.c.h.b16 %v1685
    %v1851 = vunpack.c.l.b16 %v1686
    %v1852 = vunpack.c.h.b16 %v1686
    %v1853 = vunpack.c.l.b16 %v1687
    %v1854 = vunpack.c.h.b16 %v1687
    %v1855 = vunpack.c.l.b16 %v1688
    %v1856 = vunpack.c.h.b16 %v1688
    %v1857 = vunpack.c.l.b16 %v1689
    %v1858 = vunpack.c.h.b16 %v1689
    %v1859 = vunpack.c.l.b16 %v1690
    %v1860 = vunpack.c.h.b16 %v1690
    %v1861 = vunpack.c.l.b16 %v1691
    %v1862 = vunpack.c.h.b16 %v1691
    %v1863 = vunpack.c.l.b16 %v1692
    %v1864 = vunpack.c.h.b16 %v1692
    %v1865 = vunpack.c.l.b16 %v1693
    %v1866 = vunpack.c.h.b16 %v1693
    %v1867 = vunpack.c.l.b16 %v1694
    %v1868 = vunpack.c.h.b16 %v1694
    %v1869 = vunpack.c.l.b16 %v1695
    %v1870 = vunpack.c.h.b16 %v1695
    %v1871 = vunpack.c.l.b16 %v1696
    %v1872 = vunpack.c.h.b16 %v1696
    %v1873 = vunpack.c.l.b16 %v1697
    %v1874 = vunpack.c.h.b16 %v1697
    %v1875 = vunpack.c.l.b16 %v1698
    %v1876 = vunpack.c.h.b16 %v1698
    %v1877 = vunpack.c.l.b16 %v1699
    %v1878 = vunpack.c.h.b16 %v1699
    %v1879 = vunpack.c.l.b16 %v1700
    %v1880 = vunpack.c.h.b16 %v1700
    %v1881 = vunpack.c.l.b16 %v1701
    %v1882 = vunpack.c.h.b16 %v1701
    %v1883 = vunpack.c.l.b16 %v1702
    %v1884 = vunpack.c.h.b16 %v1702
    %v1885 = vunpack.c.l.b16 %v1703
    %v1886 = vunpack.c.h.b16 %v1703
    %v1887 = vunpack.c.l.b16 %v1704
    %v1888 = vunpack.c.h.b16 %v1704
    %v1889 = vunpack.c.l.b16 %v1705
    %v1890 = vunpack.c.h.b16 %v1705
    %v1891 = vunpack.c.l.b16 %v1706
    %v1892 = vunpack.c.h.b16 %v1706
    %v1893 = vunpack.c.l.b16 %v1707
    %v1894 = vunpack.c.h.b16 %v1707
    %v1895 = vunpack.c.l.b16 %v1708
    %v1896 = vunpack.c.h.b16 %v1708
    %v1897 = vunpack.c.l.b16 %v1709
    %v1898 = vunpack.c.h.b16 %v1709
    %v1899 = vunpack.c.l.b16 %v1710
    %v1900 = vunpack.c.h.b16 %v1710
    %v1901 = vunpack.c.l.b16 %v1711
    %v1902 = vunpack.c.h.b16 %v1711
    %v1903 = vunpack.c.l.b16 %v1712
    %v1904 = vunpack.c.h.b16 %v1712
    %v1905 = vunpack.c.l.b16 %v1713
    %v1906 = vunpack.c.h.b16 %v1713
    %v1907 = vunpack.c.l.b16 %v1714
    %v1908 = vunpack.c.h.b16 %v1714
    %v1909 = vunpack.c.l.b16 %v1715
    %v1910 = vunpack.c.h.b16 %v1715
    %v1911 = vunpack.c.l.b16 %v1716
    %v1912 = vunpack.c.h.b16 %v1716
    %v1913 = vunpack.c.l.b16 %v1717
    %v1914 = vunpack.c.h.b16 %v1717
    %v1915 = vunpack.c.l.b16 %v1718
    %v1916 = vunpack.c.h.b16 %v1718
    %v1917 = vunpack.c.l.b16 %v1719
    %v1918 = vunpack.c.h.b16 %v1719
    %v1919 = vunpack.c.l.b16 %v1720
    %v1920 = vunpack.c.h.b16 %v1720
    %v1921 = vunpack.c.l.b16 %v1721
    %v1922 = vunpack.c.h.b16 %v1721
    %v1923 = vunpack.c.l.b16 %v1722
    %v1924 = vunpack.c.h.b16 %v1722
    %v1925 = vunpack.c.l.b16 %v1723
    %v1926 = vunpack.c.h.b16 %v1723
    %v1927 = vunpack.c.l.b16 %v1724
    %v1928 = vunpack.c.h.b16 %v1724
    %v1929 = vpack.c.b16 %v1803, %v1801
    %v1930 = vpack.c.b16 %v1804, %v1802
    %v1931 = vpack.c.b16 %v1807, %v1805
    %v1932 = vpack.c.b16 %v1808, %v1806
    %v1933 = vpack.c.b16 %v1811, %v1809
    %v1934 = vpack.c.b16 %v1812, %v1810
    %v1935 = vpack.c.b16 %v1815, %v1813
    %v1936 = vpack.c.b16 %v1816, %v1814
    %v1937 = vpack.c.b16 %v1819, %v1817
    %v1938 = vpack.c.b16 %v1820, %v1818
    %v1939 = vpack.c.b16 %v1823, %v1821
    %v1940 = vpack.c.b16 %v1824, %v1822
    %v1941 = vpack.c.b16 %v1827, %v1825
    %v1942 = vpack.c.b16 %v1828, %v1826
    %v1943 = vpack.c.b16 %v1831, %v1829
    %v1944 = vpack.c.b16 %v1832, %v1830
    %v1945 = vpack.c.b16 %v1835, %v1833
    %v1946 = vpack.c.b16 %v1836, %v1834
    %v1947 = vpack.c.b16 %v1839, %v1837
    %v1948 = vpack.c.b16 %v1840, %v1838
    %v1949 = vpack.c.b16 %v1843, %v1841
    %v1950 = vpack.c.b16 %v1844, %v1842
    %v1951 = vpack.c.b16 %v1847, %v1845
    %v1952 = vpack.c.b16 %v1848, %v1846
    %v1953 = vpack.c.b16 %v1851, %v1849
    %v1954 = vpack.c.b16 %v1852, %v1850
    %v1955 = vpack.c.b16 %v1855, %v1853
    %v1956 = vpack.c.b16 %v1856, %v1854
    %v1957 = vpack.c.b16 %v1859, %v1857
    %v1958 = vpack.c.b16 %v1860, %v1858
    %v1959 = vpack.c.b16 %v1863, %v1861
    %v1960 = vpack.c.b16 %v1864, %v1862
    %v1961 = vpack.c.b16 %v1867, %v1865
    %v1962 = vpack.c.b16 %v1868, %v1866
    %v1963 = vpack.c.b16 %v1871, %v1869
    %v1964 = vpack.c.b16 %v1872, %v1870
    %v1965 = vpack.c.b16 %v1875, %v1873
    %v1966 = vpack.c.b16 %v1876, %v1874
    %v1967 = vpack.c.b16 %v1879, %v1877
    %v1968 = vpack.c.b16 %v1880, %v1878
    %v1969 = vpack.c.b16 %v1883, %v1881
    %v1970 = vpack.c.b16 %v1884, %v1882
    %v1971 = vpack.c.b16 %v1887, %v1885
    %v1972 = vpack.c.b16 %v1888, %v1886
    %v1973 = vpack.c.b16 %v1891, %v1889
    %v1974 = vpack.c.b16 %v1892, %v1890
    %v1975 = vpack.c.b16 %v1895, %v1893
    %v1976 = vpack.c.b16 %v1896, %v1894
    %v1977 = vpack.c.b16 %v1899, %v1897
    %v1978 = vpack.c.b16 %v1900, %v1898
    %v1979 = vpack.c.b16 %v1903, %v1901
    %v1980 = vpack.c.b16 %v1904, %v1902
    %v1981 = vpack.c.b16 %v1907, %v1905
    %v1982 = vpack.c.b16 %v1908, %v1906
    %v1983 = vpack.c.b16 %v1911, %v1909
    %v1984 = vpack.c.b16 %v1912, %v1910
    %v1985 = vpack.c.b16 %v1915, %v1913
    %v1986 = vpack.c.b16 %v1916, %v1914
    %v1987 = vpack.c.b16 %v1919, %v1917
    %v1988 = vpack.c.b16 %v1920, %v1918
    %v1989 = vpack.c.b16 %v1923, %v1921
    %v1990 = vpack.c.b16 %v1924, %v1922
    %v1991 = vpack.c.b16 %v1927, %v1925
    %v1992 = vpack.c.b16 %v1928, %v1926
    %2057 = vmatprep.subr.bf16.mxu0 %v1930
    %2058 = vmatpush1.bf16.msra.mxu0 %v1929
    %2059 = vmatprep.subr.bf16.mxu0 %v1932
    %2060 = vmatpush1.bf16.msra.mxu0 %v1931
    %2061 = vmatprep.subr.bf16.mxu0 %v1934
    %2062 = vmatpush1.bf16.msra.mxu0 %v1933
    %2063 = vmatprep.subr.bf16.mxu0 %v1936
    %2064 = vmatpush1.bf16.msra.mxu0 %v1935
    %2065 = vmatprep.subr.bf16.mxu0 %v1938
    %2066 = vmatpush1.bf16.msra.mxu0 %v1937
    %2067 = vmatprep.subr.bf16.mxu0 %v1940
    %2068 = vmatpush1.bf16.msra.mxu0 %v1939
    %2069 = vmatprep.subr.bf16.mxu0 %v1942
    %2070 = vmatpush1.bf16.msra.mxu0 %v1941
    %2071 = vmatprep.subr.bf16.mxu0 %v1944
    %2072 = vmatpush1.bf16.msra.mxu0 %v1943
    %2073 = vmatprep.subr.bf16.mxu0 %v1946
    %2074 = vmatpush1.bf16.msra.mxu0 %v1945
    %2075 = vmatprep.subr.bf16.mxu0 %v1948
    %2076 = vmatpush1.bf16.msra.mxu0 %v1947
    %2077 = vmatprep.subr.bf16.mxu0 %v1950
    %2078 = vmatpush1.bf16.msra.mxu0 %v1949
    %2079 = vmatprep.subr.bf16.mxu0 %v1952
    %2080 = vmatpush1.bf16.msra.mxu0 %v1951
    %2081 = vmatprep.subr.bf16.mxu0 %v1954
    %2082 = vmatpush1.bf16.msra.mxu0 %v1953
    %2083 = vmatprep.subr.bf16.mxu0 %v1956
    %2084 = vmatpush1.bf16.msra.mxu0 %v1955
    %2085 = vmatprep.subr.bf16.mxu0 %v1958
    %2086 = vmatpush1.bf16.msra.mxu0 %v1957
    %2087 = vmatprep.subr.bf16.mxu0 %v1960
    %2088 = vmatpush1.bf16.msra.mxu0 %v1959
    %2089 = vmatprep.mubr.bf16.mxu0 %v1658
    %2090 = vmatmul.mubr.bf16.gmra.mrb[0].mxu0 %v1657
    %v2091 = vpop.f32.mrb[0].mxu0
    %v2092 = vadd.f32 %v1730, %v2091
    %v2093 = vpop.f32.mrb[0].mxu0
    %v2094 = vadd.f32 %v1734, %v2093
    %v2095 = vpop.f32.mrb[0].mxu0
    %v2096 = vpop.f32.mrb[0].mxu0
    %2097 = vdwg.mxu0
    %2098 = vmatprep.subr.bf16.mxu0 %v1962
    %2099 = vmatpush1.bf16.msra.mxu0 %v1961
    %2100 = vmatprep.subr.bf16.mxu0 %v1964
    %2101 = vmatpush1.bf16.msra.mxu0 %v1963
    %2102 = vmatprep.subr.bf16.mxu0 %v1966
    %2103 = vmatpush1.bf16.msra.mxu0 %v1965
    %2104 = vmatprep.subr.bf16.mxu0 %v1968
    %2105 = vmatpush1.bf16.msra.mxu0 %v1967
    %2106 = vmatprep.subr.bf16.mxu0 %v1970
    %2107 = vmatpush1.bf16.msra.mxu0 %v1969
    %2108 = vmatprep.subr.bf16.mxu0 %v1972
    %2109 = vmatpush1.bf16.msra.mxu0 %v1971
    %2110 = vmatprep.subr.bf16.mxu0 %v1974
    %2111 = vmatpush1.bf16.msra.mxu0 %v1973
    %2112 = vmatprep.subr.bf16.mxu0 %v1976
    %2113 = vmatpush1.bf16.msra.mxu0 %v1975
    %2114 = vmatprep.subr.bf16.mxu0 %v1978
    %2115 = vmatpush1.bf16.msra.mxu0 %v1977
    %2116 = vmatprep.subr.bf16.mxu0 %v1980
    %2117 = vmatpush1.bf16.msra.mxu0 %v1979
    %2118 = vmatprep.subr.bf16.mxu0 %v1982
    %2119 = vmatpush1.bf16.msra.mxu0 %v1981
    %2120 = vmatprep.subr.bf16.mxu0 %v1984
    %2121 = vmatpush1.bf16.msra.mxu0 %v1983
    %2122 = vmatprep.subr.bf16.mxu0 %v1986
    %2123 = vmatpush1.bf16.msra.mxu0 %v1985
    %2124 = vmatprep.subr.bf16.mxu0 %v1988
    %2125 = vmatpush1.bf16.msra.mxu0 %v1987
    %2126 = vmatprep.subr.bf16.mxu0 %v1990
    %2127 = vmatpush1.bf16.msra.mxu0 %v1989
    %2128 = vmatprep.subr.bf16.mxu0 %v1992
    %2129 = vmatpush1.bf16.msra.mxu0 %v1991
    %2130 = vmatprep.mubr.bf16.mxu0 %v1660
    %2131 = vmatmul.mubr.bf16.gmra.mrb[0].mxu0 %v1659
    %v2132 = vpop.f32.mrb[0].mxu0
    %v2133 = vadd.f32 %v2092, %v2132
    %v2134 = vpop.f32.mrb[0].mxu0
    %v2135 = vadd.f32 %v2094, %v2134
    %v2136 = vpop.f32.mrb[0].mxu0
    %v2137 = vpop.f32.mrb[0].mxu0
    %2138 = vdwg.mxu0
    %v2139 = vmax.f32 %v2133, 0.0
    %v2140 = vmax.f32 %v2135, 0.0
    %v2141 = vpack.c.bf16 %v2139, %v2139
    %v2142 = vpack.c.bf16 %v2140, %v2140
    %v2143 = vld [vmem:[#allocation5] sm:$0xf]
    %v2144 = vld [vmem:[#allocation5 + $0x4] sm:$0xf]
    %v2145 = vld [vmem:[#allocation5 + $0x8] sm:$0xf]
    %v2146 = vld [vmem:[#allocation5 + $0xc] sm:$0xf]
    %v2147 = vld [vmem:[#allocation5 + $0x10] sm:$0xf]
    %v2148 = vld [vmem:[#allocation5 + $0x14] sm:$0xf]
    %v2149 = vld [vmem:[#allocation5 + $0x18] sm:$0xf]
    %v2150 = vld [vmem:[#allocation5 + $0x1c] sm:$0xf]
    %v2151 = vld [vmem:[#allocation5 + $0x20] sm:$0xf]
    %v2152 = vld [vmem:[#allocation5 + $0x24] sm:$0xf]
    %v2153 = vld [vmem:[#allocation5 + $0x28] sm:$0xf]
    %v2154 = vld [vmem:[#allocation5 + $0x2c] sm:$0xf]
    %v2155 = vld [vmem:[#allocation5 + $0x30] sm:$0xf]
    %v2156 = vld [vmem:[#allocation5 + $0x34] sm:$0xf]
    %v2157 = vld [vmem:[#allocation5 + $0x38] sm:$0xf]
    %v2158 = vld [vmem:[#allocation5 + $0x3c] sm:$0xf]
    %v2159 = vld [vmem:[#allocation5 + $0x40] sm:$0xf]
    %v2160 = vld [vmem:[#allocation5 + $0x44] sm:$0xf]
    %v2161 = vld [vmem:[#allocation5 + $0x48] sm:$0xf]
    %v2162 = vld [vmem:[#allocation5 + $0x4c] sm:$0xf]
    %v2163 = vld [vmem:[#allocation5 + $0x50] sm:$0xf]
    %v2164 = vld [vmem:[#allocation5 + $0x54] sm:$0xf]
    %v2165 = vld [vmem:[#allocation5 + $0x58] sm:$0xf]
    %v2166 = vld [vmem:[#allocation5 + $0x5c] sm:$0xf]
    %v2167 = vld [vmem:[#allocation5 + $0x60] sm:$0xf]
    %v2168 = vld [vmem:[#allocation5 + $0x64] sm:$0xf]
    %v2169 = vld [vmem:[#allocation5 + $0x68] sm:$0xf]
    %v2170 = vld [vmem:[#allocation5 + $0x6c] sm:$0xf]
    %v2171 = vld [vmem:[#allocation5 + $0x70] sm:$0xf]
    %v2172 = vld [vmem:[#allocation5 + $0x74] sm:$0xf]
    %v2173 = vld [vmem:[#allocation5 + $0x78] sm:$0xf]
    %v2174 = vld [vmem:[#allocation5 + $0x7c] sm:$0xf]
    %v2175 = vld [vmem:[%s6] sm:$0x1]
    %v2177 = vlaneseq
    %v2178 = vshrl.u32 %v2177, 7
    %v2179 = vsub.s32 0, %v2178
    %v2180 = vrot.slane %v2175, %v2179
    %v2214 = vunpack.c.l.b16 %v2143
    %v2215 = vunpack.c.l.b16 %v2144
    %v2216 = vunpack.c.l.b16 %v2145
    %v2217 = vunpack.c.l.b16 %v2146
    %v2218 = vunpack.c.l.b16 %v2147
    %v2219 = vunpack.c.l.b16 %v2148
    %v2220 = vunpack.c.l.b16 %v2149
    %v2221 = vunpack.c.l.b16 %v2150
    %v2222 = vunpack.c.l.b16 %v2151
    %v2223 = vunpack.c.l.b16 %v2152
    %v2224 = vunpack.c.l.b16 %v2153
    %v2225 = vunpack.c.l.b16 %v2154
    %v2226 = vunpack.c.l.b16 %v2155
    %v2227 = vunpack.c.l.b16 %v2156
    %v2228 = vunpack.c.l.b16 %v2157
    %v2229 = vunpack.c.l.b16 %v2158
    %v2230 = vunpack.c.l.b16 %v2159
    %v2231 = vunpack.c.l.b16 %v2160
    %v2232 = vunpack.c.l.b16 %v2161
    %v2233 = vunpack.c.l.b16 %v2162
    %v2234 = vunpack.c.l.b16 %v2163
    %v2235 = vunpack.c.l.b16 %v2164
    %v2236 = vunpack.c.l.b16 %v2165
    %v2237 = vunpack.c.l.b16 %v2166
    %v2238 = vunpack.c.l.b16 %v2167
    %v2239 = vunpack.c.l.b16 %v2168
    %v2240 = vunpack.c.l.b16 %v2169
    %v2241 = vunpack.c.l.b16 %v2170
    %v2242 = vunpack.c.l.b16 %v2171
    %v2243 = vunpack.c.l.b16 %v2172
    %v2244 = vunpack.c.l.b16 %v2173
    %v2245 = vunpack.c.l.b16 %v2174
    %v2246 = vpack.c.b16 %v2215, %v2214
    %v2247 = vpack.c.b16 %v2217, %v2216
    %v2248 = vpack.c.b16 %v2219, %v2218
    %v2249 = vpack.c.b16 %v2221, %v2220
    %v2250 = vpack.c.b16 %v2223, %v2222
    %v2251 = vpack.c.b16 %v2225, %v2224
    %v2252 = vpack.c.b16 %v2227, %v2226
    %v2253 = vpack.c.b16 %v2229, %v2228
    %v2254 = vpack.c.b16 %v2231, %v2230
    %v2255 = vpack.c.b16 %v2233, %v2232
    %v2256 = vpack.c.b16 %v2235, %v2234
    %v2257 = vpack.c.b16 %v2237, %v2236
    %v2258 = vpack.c.b16 %v2239, %v2238
    %v2259 = vpack.c.b16 %v2241, %v2240
    %v2260 = vpack.c.b16 %v2243, %v2242
    %v2261 = vpack.c.b16 %v2245, %v2244
    %2278 = vmatprep.subr.bf16.mxu0 0
    %2279 = vmatpush1.bf16.msra.mxu0 %v2246
    %2280 = vmatprep.subr.bf16.mxu0 0
    %2281 = vmatpush1.bf16.msra.mxu0 %v2247
    %2282 = vmatprep.subr.bf16.mxu0 0
    %2283 = vmatpush1.bf16.msra.mxu0 %v2248
    %2284 = vmatprep.subr.bf16.mxu0 0
    %2285 = vmatpush1.bf16.msra.mxu0 %v2249
    %2286 = vmatprep.subr.bf16.mxu0 0
    %2287 = vmatpush1.bf16.msra.mxu0 %v2250
    %2288 = vmatprep.subr.bf16.mxu0 0
    %2289 = vmatpush1.bf16.msra.mxu0 %v2251
    %2290 = vmatprep.subr.bf16.mxu0 0
    %2291 = vmatpush1.bf16.msra.mxu0 %v2252
    %2292 = vmatprep.subr.bf16.mxu0 0
    %2293 = vmatpush1.bf16.msra.mxu0 %v2253
    %2294 = vmatprep.subr.bf16.mxu0 0
    %2295 = vmatpush1.bf16.msra.mxu0 %v2254
    %2296 = vmatprep.subr.bf16.mxu0 0
    %2297 = vmatpush1.bf16.msra.mxu0 %v2255
    %2298 = vmatprep.subr.bf16.mxu0 0
    %2299 = vmatpush1.bf16.msra.mxu0 %v2256
    %2300 = vmatprep.subr.bf16.mxu0 0
    %2301 = vmatpush1.bf16.msra.mxu0 %v2257
    %2302 = vmatprep.subr.bf16.mxu0 0
    %2303 = vmatpush1.bf16.msra.mxu0 %v2258
    %2304 = vmatprep.subr.bf16.mxu0 0
    %2305 = vmatpush1.bf16.msra.mxu0 %v2259
    %2306 = vmatprep.subr.bf16.mxu0 0
    %2307 = vmatpush1.bf16.msra.mxu0 %v2260
    %2308 = vmatprep.subr.bf16.mxu0 0
    %2309 = vmatpush1.bf16.msra.mxu0 %v2261
    %2310 = vmatprep.mubr.bf16.mxu0 %v2142
    %2311 = vmatmul.mubr.bf16.gmra.mrb[0].mxu0 %v2141
    %v2312 = vpop.f32.mrb[0].mxu0
    %v2313 = vadd.f32 %v2180, %v2312
    %v2314 = vpop.f32.mrb[0].mxu0
    %v2315 = vpop.f32.mrb[0].mxu0
    %v2316 = vpop.f32.mrb[0].mxu0
    %2317 = vdwg.mxu0
    %v2318 = vmax.f32 %v2313, 0.0
    %v2319 = vpack.c.bf16 %v2318, %v2318
    %v2320 = vld [vmem:[#allocation7] sm:$0xf]
    %v2321 = vld [vmem:[#allocation7 + $0x4] sm:$0xf]
    %v2322 = vld [vmem:[#allocation7 + $0x8] sm:$0xf]
    %v2323 = vld [vmem:[#allocation7 + $0xc] sm:$0xf]
    %v2324 = vld [vmem:[#allocation7 + $0x10] sm:$0xf]
    %v2325 = vld [vmem:[#allocation7 + $0x14] sm:$0xf]
    %v2326 = vld [vmem:[#allocation7 + $0x18] sm:$0xf]
    %v2327 = vld [vmem:[#allocation7 + $0x1c] sm:$0xf]
    %v2328 = vld [vmem:[#allocation7 + $0x20] sm:$0xf]
    %v2329 = vld [vmem:[#allocation7 + $0x24] sm:$0xf]
    %v2330 = vld [vmem:[#allocation7 + $0x28] sm:$0xf]
    %v2331 = vld [vmem:[#allocation7 + $0x2c] sm:$0xf]
    %v2332 = vld [vmem:[#allocation7 + $0x30] sm:$0xf]
    %v2333 = vld [vmem:[#allocation7 + $0x34] sm:$0xf]
    %v2334 = vld [vmem:[#allocation7 + $0x38] sm:$0xf]
    %v2335 = vld [vmem:[#allocation7 + $0x3c] sm:$0xf]
    %v2336 = vld [vmem:[%s8] sm:$0x1]
    %v2338 = vlaneseq
    %v2339 = vshrl.u32 %v2338, 7
    %v2340 = vsub.s32 0, %v2339
    %v2341 = vrot.slane %v2336, %v2340
    %v2359 = vunpack.c.l.b16 %v2320
    %v2360 = vunpack.c.l.b16 %v2321
    %v2361 = vunpack.c.l.b16 %v2322
    %v2362 = vunpack.c.l.b16 %v2323
    %v2363 = vunpack.c.l.b16 %v2324
    %v2364 = vunpack.c.l.b16 %v2325
    %v2365 = vunpack.c.l.b16 %v2326
    %v2366 = vunpack.c.l.b16 %v2327
    %v2367 = vunpack.c.l.b16 %v2328
    %v2368 = vunpack.c.l.b16 %v2329
    %v2369 = vunpack.c.l.b16 %v2330
    %v2370 = vunpack.c.l.b16 %v2331
    %v2371 = vunpack.c.l.b16 %v2332
    %v2372 = vunpack.c.l.b16 %v2333
    %v2373 = vunpack.c.l.b16 %v2334
    %v2374 = vunpack.c.l.b16 %v2335
    %v2375 = vpack.c.b16 %v2360, %v2359
    %v2376 = vpack.c.b16 %v2362, %v2361
    %v2377 = vpack.c.b16 %v2364, %v2363
    %v2378 = vpack.c.b16 %v2366, %v2365
    %v2379 = vpack.c.b16 %v2368, %v2367
    %v2380 = vpack.c.b16 %v2370, %v2369
    %v2381 = vpack.c.b16 %v2372, %v2371
    %v2382 = vpack.c.b16 %v2374, %v2373
    %2391 = vmatprep.subr.bf16.mxu0 0
    %2392 = vmatpush1.bf16.msra.mxu0 %v2375
    %2393 = vmatprep.subr.bf16.mxu0 0
    %2394 = vmatpush1.bf16.msra.mxu0 %v2376
    %2395 = vmatprep.subr.bf16.mxu0 0
    %2396 = vmatpush1.bf16.msra.mxu0 %v2377
    %2397 = vmatprep.subr.bf16.mxu0 0
    %2398 = vmatpush1.bf16.msra.mxu0 %v2378
    %2399 = vmatprep.subr.bf16.mxu0 0
    %2400 = vmatpush1.bf16.msra.mxu0 %v2379
    %2401 = vmatprep.subr.bf16.mxu0 0
    %2402 = vmatpush1.bf16.msra.mxu0 %v2380
    %2403 = vmatprep.subr.bf16.mxu0 0
    %2404 = vmatpush1.bf16.msra.mxu0 %v2381
    %2405 = vmatprep.subr.bf16.mxu0 0
    %2406 = vmatpush1.bf16.msra.mxu0 %v2382
    %2407 = vmatprep.subr.bf16.mxu0 0
    %2408 = vmatpush1.bf16.msra.mxu0 0
    %2409 = vmatprep.subr.bf16.mxu0 0
    %2410 = vmatpush1.bf16.msra.mxu0 0
    %2411 = vmatprep.subr.bf16.mxu0 0
    %2412 = vmatpush1.bf16.msra.mxu0 0
    %2413 = vmatprep.subr.bf16.mxu0 0
    %2414 = vmatpush1.bf16.msra.mxu0 0
    %2415 = vmatprep.subr.bf16.mxu0 0
    %2416 = vmatpush1.bf16.msra.mxu0 0
    %2417 = vmatprep.subr.bf16.mxu0 0
    %2418 = vmatpush1.bf16.msra.mxu0 0
    %2419 = vmatprep.subr.bf16.mxu0 0
    %2420 = vmatpush1.bf16.msra.mxu0 0
    %2421 = vmatprep.subr.bf16.mxu0 0
    %2422 = vmatpush1.bf16.msra.mxu0 0
    %2423 = vmatprep.mubr.bf16.mxu0 0
    %2424 = vmatmul.mubr.bf16.gmra.mrb[0].mxu0 %v2319
    %v2425 = vpop.f32.mrb[0].mxu0
    %v2426 = vadd.f32 %v2341, %v2425
    %v2427 = vpop.f32.mrb[0].mxu0
    %v2428 = vpop.f32.mrb[0].mxu0
    %v2429 = vpop.f32.mrb[0].mxu0
    %2430 = vdwg.mxu0
    %v2431 = vmax.f32 %v2426, 0.0
    %v2432 = vpack.c.bf16 %v2431, %v2431
    %v2433 = vld [vmem:[#allocation8] sm:$0xf]
    %v2434 = vld [vmem:[#allocation8 + $0x4] sm:$0xf]
    %v2435 = vld [vmem:[#allocation8 + $0x8] sm:$0xf]
    %v2436 = vld [vmem:[#allocation8 + $0xc] sm:$0xf]
    %v2437 = vld [vmem:[#allocation8 + $0x10] sm:$0xf]
    %v2438 = vld [vmem:[#allocation8 + $0x14] sm:$0xf]
    %v2439 = vld [vmem:[#allocation8 + $0x18] sm:$0xf]
    %v2440 = vld [vmem:[#allocation8 + $0x1c] sm:$0xf]
    %v2441 = vld [vmem:[#allocation8 + $0x20] sm:$0xf]
    %v2442 = vld [vmem:[#allocation8 + $0x24] sm:$0xf]
    %v2443 = vld [vmem:[#allocation8 + $0x28] sm:$0xf]
    %v2444 = vld [vmem:[#allocation8 + $0x2c] sm:$0xf]
    %v2445 = vld [vmem:[#allocation8 + $0x30] sm:$0xf]
    %v2446 = vld [vmem:[#allocation8 + $0x34] sm:$0xf]
    %v2447 = vld [vmem:[#allocation8 + $0x38] sm:$0xf]
    %v2448 = vld [vmem:[#allocation8 + $0x3c] sm:$0xf]
    %v2449 = vld [vmem:[%s10] sm:$0x1]
    %v2451 = vlaneseq
    %v2452 = vshrl.u32 %v2451, 7
    %v2453 = vsub.s32 0, %v2452
    %v2454 = vrot.slane %v2449, %v2453
    %v2472 = vunpack.c.l.b16 %v2433
    %v2473 = vunpack.c.l.b16 %v2434
    %v2474 = vunpack.c.l.b16 %v2435
    %v2475 = vunpack.c.l.b16 %v2436
    %v2476 = vunpack.c.l.b16 %v2437
    %v2477 = vunpack.c.l.b16 %v2438
    %v2478 = vunpack.c.l.b16 %v2439
    %v2479 = vunpack.c.l.b16 %v2440
    %v2480 = vunpack.c.l.b16 %v2441
    %v2481 = vunpack.c.l.b16 %v2442
    %v2482 = vunpack.c.l.b16 %v2443
    %v2483 = vunpack.c.l.b16 %v2444
    %v2484 = vunpack.c.l.b16 %v2445
    %v2485 = vunpack.c.l.b16 %v2446
    %v2486 = vunpack.c.l.b16 %v2447
    %v2487 = vunpack.c.l.b16 %v2448
    %v2488 = vpack.c.b16 %v2473, %v2472
    %v2489 = vpack.c.b16 %v2475, %v2474
    %v2490 = vpack.c.b16 %v2477, %v2476
    %v2491 = vpack.c.b16 %v2479, %v2478
    %v2492 = vpack.c.b16 %v2481, %v2480
    %v2493 = vpack.c.b16 %v2483, %v2482
    %v2494 = vpack.c.b16 %v2485, %v2484
    %v2495 = vpack.c.b16 %v2487, %v2486
    %2504 = vmatprep.subr.bf16.mxu0 0
    %2505 = vmatpush1.bf16.msra.mxu0 %v2488
    %2506 = vmatprep.subr.bf16.mxu0 0
    %2507 = vmatpush1.bf16.msra.mxu0 %v2489
    %2508 = vmatprep.subr.bf16.mxu0 0
    %2509 = vmatpush1.bf16.msra.mxu0 %v2490
    %2510 = vmatprep.subr.bf16.mxu0 0
    %2511 = vmatpush1.bf16.msra.mxu0 %v2491
    %2512 = vmatprep.subr.bf16.mxu0 0
    %2513 = vmatpush1.bf16.msra.mxu0 %v2492
    %2514 = vmatprep.subr.bf16.mxu0 0
    %2515 = vmatpush1.bf16.msra.mxu0 %v2493
    %2516 = vmatprep.subr.bf16.mxu0 0
    %2517 = vmatpush1.bf16.msra.mxu0 %v2494
    %2518 = vmatprep.subr.bf16.mxu0 0
    %2519 = vmatpush1.bf16.msra.mxu0 %v2495
    %2520 = vmatprep.subr.bf16.mxu0 0
    %2521 = vmatpush1.bf16.msra.mxu0 0
    %2522 = vmatprep.subr.bf16.mxu0 0
    %2523 = vmatpush1.bf16.msra.mxu0 0
    %2524 = vmatprep.subr.bf16.mxu0 0
    %2525 = vmatpush1.bf16.msra.mxu0 0
    %2526 = vmatprep.subr.bf16.mxu0 0
    %2527 = vmatpush1.bf16.msra.mxu0 0
    %2528 = vmatprep.subr.bf16.mxu0 0
    %2529 = vmatpush1.bf16.msra.mxu0 0
    %2530 = vmatprep.subr.bf16.mxu0 0
    %2531 = vmatpush1.bf16.msra.mxu0 0
    %2532 = vmatprep.subr.bf16.mxu0 0
    %2533 = vmatpush1.bf16.msra.mxu0 0
    %2534 = vmatprep.subr.bf16.mxu0 0
    %2535 = vmatpush1.bf16.msra.mxu0 0
    %2536 = vmatprep.mubr.bf16.mxu0 0
    %2537 = vmatmul.mubr.bf16.gmra.mrb[0].mxu0 %v2432
    %v2538 = vpop.f32.mrb[0].mxu0
    %v2539 = vadd.f32 %v2454, %v2538
    %v2540 = vpop.f32.mrb[0].mxu0
    %v2541 = vpop.f32.mrb[0].mxu0
    %v2542 = vpop.f32.mrb[0].mxu0
    %2543 = vdwg.mxu0
    %2544 = vmax.xlane.f32.xlu0 %v2539
    %v2545 = vpop.xlane.xlu0 %2544
    %v2546 = vsub.f32 %v2539, %v2545
    %v2547 = vmul.f32 %v2546, 1.442695
    %v2548 = vpow.pop %v2547
    %2549 = vadd.xlane.f32.xlu0 %v2548
    %v2550 = vpop.xlane.xlu0 %2549
    %v2551 = vlog2.pop %v2550
    %v2552 = vmul.f32 %v2551, 0.6931472
    %v2553 = vsub.f32 %v2546, %v2552
    %2554 = vst [vmem:[#allocation10] sm:$0xff] %v2553
    // Predicated region
    $region62: #{mlp_forward.1} parent=1 // pred_check
      _
    $region63: #{mlp_forward.1} parent=1 // pred_check_branch
      %2556 = sbr.rel (0) target = $region65
    $region64: #{mlp_forward.1} parent=1 // pred_region
      %s2558 = ssub.s32 128, 128
      %2559 = vsyncadd [#allocation4], %s2558
      %s2561 = sshll.u32 [#allocation10], 4
      %s2562 = int_to_ptr.vmem [resolvable:$true] %s2561
      %2564 = dma.vmem_to_hbm [thread:$0]  %s2562, 128, %s11, [#allocation4]
    $region65: #{mlp_forward.1} parent=1 // pred_fallthru
      _
    // Predicated region
    $region66: #{mlp_forward.1} parent=1 // pred_check
      _
    $region67: #{mlp_forward.1} parent=1 // pred_check_branch
      %2566 = sbr.rel (0) target = $region69
    $region68: #{mlp_forward.1} parent=1 // pred_region
      %2567 = dma.done [#allocation4], 128
    $region69: #{mlp_forward.1} parent=1 // pred_fallthru
      _
    %2568 = vsyncpa [#allocation3], 1
    %2569 = vsyncpa [#allocation6], 1
    %2570 = vsyncpa [#allocation9], 1
    %2571 = vsyncpa [#allocation4], 1

</llo_original>
